<compile_context>
chip_gen: v6e
topology: v6e:2x2x1
jax: 0.10.0
libtpu: 0.0.40
codegen_flags: <defaults>
</compile_context>

<pallas_src>
import functools

import jax
import jax.numpy as jnp
from jax.experimental import pallas as pl
from jax.experimental.pallas import tpu as pltpu


def _mlp_kernel(x_ref, b_ref, w_hbm, o_ref, w_buf, sem):
    """Whole network in one invocation with per-layer weight prefetch.

    x_ref : (B, H)      padded f32 input (VMEM)
    b_ref : (L, 1, H)   f32 biases (VMEM)
    w_hbm : (L, H, H)   bf16 pre-transposed weights (HBM, manual DMA)
    o_ref : (B, H)      padded f32 output (VMEM, written once)
    w_buf : (2, H, H)   bf16 double-buffer scratch (VMEM)
    sem   : (2,)        DMA completion semaphores
    """
    L = w_hbm.shape[0]

    def start_copy(layer, slot):
        pltpu.make_async_copy(w_hbm.at[layer], w_buf.at[slot], sem.at[slot]).start()

    def wait_copy(layer, slot):
        pltpu.make_async_copy(w_hbm.at[layer], w_buf.at[slot], sem.at[slot]).wait()

    # Prime the pipeline with layer 0's weight tile.
    start_copy(0, 0)

    # Register-resident f32 activation carry (one vreg at B=8, H=128).
    h = x_ref[...]

    # Statically unrolled layer chain (L is small).
    for l in range(L):
        slot = l & 1
        # Kick off the next layer's weight DMA before this layer's compute so
        # the HBM->VMEM copy hides behind the MXU work.
        if l + 1 < L:
            start_copy(l + 1, 1 - slot)
        wait_copy(l, slot)

        # bf16 operands into the MXU, f32 accumulation.
        z = jnp.dot(h.astype(jnp.bfloat16), w_buf[slot],
                    preferred_element_type=jnp.float32)
        z = z + b_ref[l]                      # (1, H) bias, f32
        if l < L - 1:
            h = jnp.maximum(z, 0.0)           # hidden layers: ReLU, f32 carry
        else:
            o_ref[...] = z.astype(o_ref.dtype)  # classifier: single store


@functools.partial(jax.jit, static_argnames=("out_size",))
def neural_net02_forward(x, w_stack, b_stack, out_size):
    """x: (B, in_size) f32; w_stack: (L, H, H) bf16 pre-transposed+padded;
    b_stack: (L, 1, H) f32.  Returns (B, out_size) f32."""
    B = x.shape[0]
    L, H, _ = w_stack.shape

    # Pad input features up to H (zero padding -> zero contribution).
    x_pad = jnp.zeros((B, H), jnp.float32).at[:, : x.shape[1]].set(
        x.astype(jnp.float32))

    flops = 2 * B * H * H * L
    bytes_accessed = (w_stack.size * 2          # bf16 weights from HBM
                      + b_stack.size * 4
                      + x_pad.size * 4
                      + B * H * 4)

    out_pad = pl.pallas_call(
        _mlp_kernel,
        out_shape=jax.ShapeDtypeStruct((B, H), jnp.float32),
        in_specs=[
            pl.BlockSpec(memory_space=pltpu.MemorySpace.VMEM),  # x_pad
            pl.BlockSpec(memory_space=pltpu.MemorySpace.VMEM),  # b_stack
            pl.BlockSpec(memory_space=pl.ANY),                  # w_stack (HBM)
        ],
        out_specs=pl.BlockSpec(memory_space=pltpu.MemorySpace.VMEM),
        scratch_shapes=[
            pltpu.VMEM((2, H, H), jnp.bfloat16),   # per-layer weight double buffer
            pltpu.SemaphoreType.DMA((2,)),
        ],
        cost_estimate=pl.CostEstimate(flops=flops, transcendentals=0,
                                      bytes_accessed=bytes_accessed),
    )(x_pad, b_stack, w_stack)

    return out_pad[:, :out_size]


def init_params(key, in_size, out_size, num_hidden_layer=10, hidden_layer_size=128):
    """Deterministic parameter init matching the PyTorch module's shapes.

    Returns stacked, zero-padded, pre-transposed weights:
      w_stack: (L, H, H) bf16  where w_stack[l] = W_l.T padded to (H, H)
      b_stack: (L, 1, H) f32
    NOTE: the kernel assumes this (in, out) pre-transposed, zero-padded layout;
    raw PyTorch (out, in) weights must be transposed before stacking.
    """
    H = hidden_layer_size
    L = num_hidden_layer + 1  # hidden layers + classifier
    w_stack = jnp.zeros((L, H, H), jnp.float32)
    b_stack = jnp.zeros((L, 1, H), jnp.float32)

    fan_in = in_size
    for l in range(L):
        fan_out = out_size if l == num_hidden_layer else H
        key, kw, kb = jax.random.split(key, 3)
        bound = 1.0 / float(fan_in) ** 0.5
        # PyTorch nn.Linear weight is (out, in); we store its transpose (in, out).
        w = jax.random.uniform(kw, (fan_in, fan_out), jnp.float32, -bound, bound)
        b = jax.random.uniform(kb, (fan_out,), jnp.float32, -bound, bound)
        w_stack = w_stack.at[l, :fan_in, :fan_out].set(w)
        b_stack = b_stack.at[l, 0, :fan_out].set(b)
        fan_in = H
    # bf16 weights: kernel is weight-movement bound and the MXU is bf16-native.
    return w_stack.astype(jnp.bfloat16), b_stack


def reference_forward(x, w_stack, b_stack, in_size, out_size, num_hidden_layer, H):
    """Pure-JAX reference of the PyTorch Sequential forward using the same
    bf16-weight / bf16-activation-input / f32-accumulate numerics as the kernel."""
    h = x.astype(jnp.float32)
    fan_in = in_size
    for l in range(num_hidden_layer + 1):
        fan_out = out_size if l == num_hidden_layer else H
        w = w_stack[l, :fan_in, :fan_out]          # bf16
        b = b_stack[l, 0, :fan_out]                # f32
        z = jnp.dot(h.astype(jnp.bfloat16), w,
                    preferred_element_type=jnp.float32) + b
        h = jnp.maximum(z, 0.0) if l != num_hidden_layer else z
        fan_in = H
    return h


if __name__ == "__main__":
    # Small, MLP-consistent shapes.
    B, IN_SIZE, OUT_SIZE = 8, 32, 16
    NUM_HIDDEN, HIDDEN = 10, 128

    key = jax.random.PRNGKey(0)
    key, kx = jax.random.split(key)
    x = jax.random.normal(kx, (B, IN_SIZE), dtype=jnp.float32)

    w_stack, b_stack = init_params(key, IN_SIZE, OUT_SIZE, NUM_HIDDEN, HIDDEN)

    out = neural_net02_forward(x, w_stack, b_stack, OUT_SIZE)
    out = jax.block_until_ready(out)

    ref = reference_forward(x, w_stack, b_stack, IN_SIZE, OUT_SIZE, NUM_HIDDEN, HIDDEN)
    assert out.shape == (B, OUT_SIZE)
    # bf16 weights: tolerance relaxed vs. a pure-f32 reference.
    assert jnp.allclose(out, ref, atol=1e-2, rtol=1e-2), "mismatch vs reference"

    print("KERNEL_OK")
</pallas_src>

<mosaic_0001>
module attributes {stable_mosaic.version = 11 : i64} {
  func.func @_mlp_kernel(%arg0: memref<8x128xf32, #tpu.memory_space<vmem>>, %arg1: memref<11x1x128xf32, #tpu.memory_space<vmem>>, %arg2: memref<11x128x128xbf16, #tpu.memory_space<any>>, %arg3: memref<8x128xf32, #tpu.memory_space<vmem>>, %arg4: memref<2x128x128xbf16, #tpu.memory_space<vmem>>, %arg5: memref<2x!tpu.dma_semaphore, #tpu.memory_space<semaphore_mem>>) attributes {dimension_semantics = [], scalar_prefetch = 0 : i64, scratch_operands = 2 : i64, tpu.core_type = #tpu.core_type<tc>} {
    %c0_i32 = arith.constant 0 : i32
    %c0_i32_0 = arith.constant 0 : i32
    %c0_i32_1 = arith.constant 0 : i32
    %c0_i32_2 = arith.constant 0 : i32
    %c0_i32_3 = arith.constant 0 : i32
    %0 = tpu.memref_slice %arg2[%c0_i32, %c0_i32_2, %c0_i32_3] : memref<11x128x128xbf16, #tpu.memory_space<any>> -> memref<1x128x128xbf16, #tpu.memory_space<any>>
    %1 = tpu.memref_squeeze %0 : memref<1x128x128xbf16, #tpu.memory_space<any>> -> memref<128x128xbf16, #tpu.memory_space<any>>
    %c0_i32_4 = arith.constant 0 : i32
    %c0_i32_5 = arith.constant 0 : i32
    %2 = tpu.memref_slice %arg4[%c0_i32_0, %c0_i32_4, %c0_i32_5] : memref<2x128x128xbf16, #tpu.memory_space<vmem>> -> memref<1x128x128xbf16, #tpu.memory_space<vmem>>
    %3 = tpu.memref_squeeze %2 : memref<1x128x128xbf16, #tpu.memory_space<vmem>> -> memref<128x128xbf16, #tpu.memory_space<vmem>>
    %4 = tpu.memref_slice %arg5[%c0_i32_1] : memref<2x!tpu.dma_semaphore, #tpu.memory_space<semaphore_mem>> -> memref<1x!tpu.dma_semaphore, #tpu.memory_space<semaphore_mem>>
    %5 = tpu.memref_squeeze %4 : memref<1x!tpu.dma_semaphore, #tpu.memory_space<semaphore_mem>> -> memref<!tpu.dma_semaphore, #tpu.memory_space<semaphore_mem>>
    tpu.enqueue_dma source(%1 : memref<128x128xbf16, #tpu.memory_space<any>>) target(%3 : memref<128x128xbf16, #tpu.memory_space<vmem>>) target_semaphore(%5 : memref<!tpu.dma_semaphore, #tpu.memory_space<semaphore_mem>>)
    %c0 = arith.constant 0 : index
    %c0_6 = arith.constant 0 : index
    %6 = vector.load %arg0[%c0, %c0_6] : memref<8x128xf32, #tpu.memory_space<vmem>>, vector<8x128xf32>
    %c1_i32 = arith.constant 1 : i32
    %c1_i32_7 = arith.constant 1 : i32
    %c1_i32_8 = arith.constant 1 : i32
    %c0_i32_9 = arith.constant 0 : i32
    %c0_i32_10 = arith.constant 0 : i32
    %7 = tpu.memref_slice %arg2[%c1_i32, %c0_i32_9, %c0_i32_10] : memref<11x128x128xbf16, #tpu.memory_space<any>> -> memref<1x128x128xbf16, #tpu.memory_space<any>>
    %8 = tpu.memref_squeeze %7 : memref<1x128x128xbf16, #tpu.memory_space<any>> -> memref<128x128xbf16, #tpu.memory_space<any>>
    %c0_i32_11 = arith.constant 0 : i32
    %c0_i32_12 = arith.constant 0 : i32
    %9 = tpu.memref_slice %arg4[%c1_i32_7, %c0_i32_11, %c0_i32_12] : memref<2x128x128xbf16, #tpu.memory_space<vmem>> -> memref<1x128x128xbf16, #tpu.memory_space<vmem>>
    %10 = tpu.memref_squeeze %9 : memref<1x128x128xbf16, #tpu.memory_space<vmem>> -> memref<128x128xbf16, #tpu.memory_space<vmem>>
    %11 = tpu.memref_slice %arg5[%c1_i32_8] : memref<2x!tpu.dma_semaphore, #tpu.memory_space<semaphore_mem>> -> memref<1x!tpu.dma_semaphore, #tpu.memory_space<semaphore_mem>>
    %12 = tpu.memref_squeeze %11 : memref<1x!tpu.dma_semaphore, #tpu.memory_space<semaphore_mem>> -> memref<!tpu.dma_semaphore, #tpu.memory_space<semaphore_mem>>
    tpu.enqueue_dma source(%8 : memref<128x128xbf16, #tpu.memory_space<any>>) target(%10 : memref<128x128xbf16, #tpu.memory_space<vmem>>) target_semaphore(%12 : memref<!tpu.dma_semaphore, #tpu.memory_space<semaphore_mem>>)
    %c0_i32_13 = arith.constant 0 : i32
    %c0_i32_14 = arith.constant 0 : i32
    %c0_i32_15 = arith.constant 0 : i32
    %c0_i32_16 = arith.constant 0 : i32
    %c0_i32_17 = arith.constant 0 : i32
    %13 = tpu.memref_slice %arg2[%c0_i32_13, %c0_i32_16, %c0_i32_17] : memref<11x128x128xbf16, #tpu.memory_space<any>> -> memref<1x128x128xbf16, #tpu.memory_space<any>>
    %14 = tpu.memref_squeeze %13 : memref<1x128x128xbf16, #tpu.memory_space<any>> -> memref<128x128xbf16, #tpu.memory_space<any>>
    %c0_i32_18 = arith.constant 0 : i32
    %c0_i32_19 = arith.constant 0 : i32
    %15 = tpu.memref_slice %arg4[%c0_i32_14, %c0_i32_18, %c0_i32_19] : memref<2x128x128xbf16, #tpu.memory_space<vmem>> -> memref<1x128x128xbf16, #tpu.memory_space<vmem>>
    %16 = tpu.memref_squeeze %15 : memref<1x128x128xbf16, #tpu.memory_space<vmem>> -> memref<128x128xbf16, #tpu.memory_space<vmem>>
    %17 = tpu.memref_slice %arg5[%c0_i32_15] : memref<2x!tpu.dma_semaphore, #tpu.memory_space<semaphore_mem>> -> memref<1x!tpu.dma_semaphore, #tpu.memory_space<semaphore_mem>>
    %18 = tpu.memref_squeeze %17 : memref<1x!tpu.dma_semaphore, #tpu.memory_space<semaphore_mem>> -> memref<!tpu.dma_semaphore, #tpu.memory_space<semaphore_mem>>
    tpu.wait_dma2 semaphore(%18 : memref<!tpu.dma_semaphore, #tpu.memory_space<semaphore_mem>>) src(%14 : memref<128x128xbf16, #tpu.memory_space<any>>) dst(%16 : memref<128x128xbf16, #tpu.memory_space<vmem>>)
    %19 = arith.truncf %6 : vector<8x128xf32> to vector<8x128xbf16>
    %c0_20 = arith.constant 0 : index
    %c0_21 = arith.constant 0 : index
    %c0_22 = arith.constant 0 : index
    %20 = vector.load %arg4[%c0_20, %c0_21, %c0_22] : memref<2x128x128xbf16, #tpu.memory_space<vmem>>, vector<1x128x128xbf16>
    %21 = vector.shape_cast %20 : vector<1x128x128xbf16> to vector<128x128xbf16>
    %cst = arith.constant dense<0.000000e+00> : vector<8x128xf32>
    %22 = tpu.matmul %19, %21, %cst {dimension_numbers = #tpu.dot_dimension_numbers<[1], [0], [0], [1], [0, 0, 1, 1], [], []>} : vector<8x128xbf16>, vector<128x128xbf16>, vector<8x128xf32> -> vector<8x128xf32>
    %c0_23 = arith.constant 0 : index
    %c0_24 = arith.constant 0 : index
    %c0_25 = arith.constant 0 : index
    %23 = vector.load %arg1[%c0_23, %c0_24, %c0_25] : memref<11x1x128xf32, #tpu.memory_space<vmem>>, vector<1x1x128xf32>
    %24 = vector.shape_cast %23 : vector<1x1x128xf32> to vector<1x128xf32>
    %25 = vector.broadcast %24 : vector<1x128xf32> to vector<8x128xf32>
    %26 = arith.addf %22, %25 : vector<8x128xf32>
    %cst_26 = arith.constant 0.000000e+00 : f32
    %27 = vector.broadcast %cst_26 : f32 to vector<8x128xf32>
    %28 = arith.maximumf %26, %27 : vector<8x128xf32>
    %c2_i32 = arith.constant 2 : i32
    %c0_i32_27 = arith.constant 0 : i32
    %c0_i32_28 = arith.constant 0 : i32
    %c0_i32_29 = arith.constant 0 : i32
    %c0_i32_30 = arith.constant 0 : i32
    %29 = tpu.memref_slice %arg2[%c2_i32, %c0_i32_29, %c0_i32_30] : memref<11x128x128xbf16, #tpu.memory_space<any>> -> memref<1x128x128xbf16, #tpu.memory_space<any>>
    %30 = tpu.memref_squeeze %29 : memref<1x128x128xbf16, #tpu.memory_space<any>> -> memref<128x128xbf16, #tpu.memory_space<any>>
    %c0_i32_31 = arith.constant 0 : i32
    %c0_i32_32 = arith.constant 0 : i32
    %31 = tpu.memref_slice %arg4[%c0_i32_27, %c0_i32_31, %c0_i32_32] : memref<2x128x128xbf16, #tpu.memory_space<vmem>> -> memref<1x128x128xbf16, #tpu.memory_space<vmem>>
    %32 = tpu.memref_squeeze %31 : memref<1x128x128xbf16, #tpu.memory_space<vmem>> -> memref<128x128xbf16, #tpu.memory_space<vmem>>
    %33 = tpu.memref_slice %arg5[%c0_i32_28] : memref<2x!tpu.dma_semaphore, #tpu.memory_space<semaphore_mem>> -> memref<1x!tpu.dma_semaphore, #tpu.memory_space<semaphore_mem>>
    %34 = tpu.memref_squeeze %33 : memref<1x!tpu.dma_semaphore, #tpu.memory_space<semaphore_mem>> -> memref<!tpu.dma_semaphore, #tpu.memory_space<semaphore_mem>>
    tpu.enqueue_dma source(%30 : memref<128x128xbf16, #tpu.memory_space<any>>) target(%32 : memref<128x128xbf16, #tpu.memory_space<vmem>>) target_semaphore(%34 : memref<!tpu.dma_semaphore, #tpu.memory_space<semaphore_mem>>)
    %c1_i32_33 = arith.constant 1 : i32
    %c1_i32_34 = arith.constant 1 : i32
    %c1_i32_35 = arith.constant 1 : i32
    %c0_i32_36 = arith.constant 0 : i32
    %c0_i32_37 = arith.constant 0 : i32
    %35 = tpu.memref_slice %arg2[%c1_i32_33, %c0_i32_36, %c0_i32_37] : memref<11x128x128xbf16, #tpu.memory_space<any>> -> memref<1x128x128xbf16, #tpu.memory_space<any>>
    %36 = tpu.memref_squeeze %35 : memref<1x128x128xbf16, #tpu.memory_space<any>> -> memref<128x128xbf16, #tpu.memory_space<any>>
    %c0_i32_38 = arith.constant 0 : i32
    %c0_i32_39 = arith.constant 0 : i32
    %37 = tpu.memref_slice %arg4[%c1_i32_34, %c0_i32_38, %c0_i32_39] : memref<2x128x128xbf16, #tpu.memory_space<vmem>> -> memref<1x128x128xbf16, #tpu.memory_space<vmem>>
    %38 = tpu.memref_squeeze %37 : memref<1x128x128xbf16, #tpu.memory_space<vmem>> -> memref<128x128xbf16, #tpu.memory_space<vmem>>
    %39 = tpu.memref_slice %arg5[%c1_i32_35] : memref<2x!tpu.dma_semaphore, #tpu.memory_space<semaphore_mem>> -> memref<1x!tpu.dma_semaphore, #tpu.memory_space<semaphore_mem>>
    %40 = tpu.memref_squeeze %39 : memref<1x!tpu.dma_semaphore, #tpu.memory_space<semaphore_mem>> -> memref<!tpu.dma_semaphore, #tpu.memory_space<semaphore_mem>>
    tpu.wait_dma2 semaphore(%40 : memref<!tpu.dma_semaphore, #tpu.memory_space<semaphore_mem>>) src(%36 : memref<128x128xbf16, #tpu.memory_space<any>>) dst(%38 : memref<128x128xbf16, #tpu.memory_space<vmem>>)
    %41 = arith.truncf %28 : vector<8x128xf32> to vector<8x128xbf16>
    %c1 = arith.constant 1 : index
    %c0_40 = arith.constant 0 : index
    %c0_41 = arith.constant 0 : index
    %42 = vector.load %arg4[%c1, %c0_40, %c0_41] : memref<2x128x128xbf16, #tpu.memory_space<vmem>>, vector<1x128x128xbf16>
    %43 = vector.shape_cast %42 : vector<1x128x128xbf16> to vector<128x128xbf16>
    %cst_42 = arith.constant dense<0.000000e+00> : vector<8x128xf32>
    %44 = tpu.matmul %41, %43, %cst_42 {dimension_numbers = #tpu.dot_dimension_numbers<[1], [0], [0], [1], [0, 0, 1, 1], [], []>} : vector<8x128xbf16>, vector<128x128xbf16>, vector<8x128xf32> -> vector<8x128xf32>
    %c1_43 = arith.constant 1 : index
    %c0_44 = arith.constant 0 : index
    %c0_45 = arith.constant 0 : index
    %45 = vector.load %arg1[%c1_43, %c0_44, %c0_45] : memref<11x1x128xf32, #tpu.memory_space<vmem>>, vector<1x1x128xf32>
    %46 = vector.shape_cast %45 : vector<1x1x128xf32> to vector<1x128xf32>
    %47 = vector.broadcast %46 : vector<1x128xf32> to vector<8x128xf32>
    %48 = arith.addf %44, %47 : vector<8x128xf32>
    %cst_46 = arith.constant 0.000000e+00 : f32
    %49 = vector.broadcast %cst_46 : f32 to vector<8x128xf32>
    %50 = arith.maximumf %48, %49 : vector<8x128xf32>
    %c3_i32 = arith.constant 3 : i32
    %c1_i32_47 = arith.constant 1 : i32
    %c1_i32_48 = arith.constant 1 : i32
    %c0_i32_49 = arith.constant 0 : i32
    %c0_i32_50 = arith.constant 0 : i32
    %51 = tpu.memref_slice %arg2[%c3_i32, %c0_i32_49, %c0_i32_50] : memref<11x128x128xbf16, #tpu.memory_space<any>> -> memref<1x128x128xbf16, #tpu.memory_space<any>>
    %52 = tpu.memref_squeeze %51 : memref<1x128x128xbf16, #tpu.memory_space<any>> -> memref<128x128xbf16, #tpu.memory_space<any>>
    %c0_i32_51 = arith.constant 0 : i32
    %c0_i32_52 = arith.constant 0 : i32
    %53 = tpu.memref_slice %arg4[%c1_i32_47, %c0_i32_51, %c0_i32_52] : memref<2x128x128xbf16, #tpu.memory_space<vmem>> -> memref<1x128x128xbf16, #tpu.memory_space<vmem>>
    %54 = tpu.memref_squeeze %53 : memref<1x128x128xbf16, #tpu.memory_space<vmem>> -> memref<128x128xbf16, #tpu.memory_space<vmem>>
    %55 = tpu.memref_slice %arg5[%c1_i32_48] : memref<2x!tpu.dma_semaphore, #tpu.memory_space<semaphore_mem>> -> memref<1x!tpu.dma_semaphore, #tpu.memory_space<semaphore_mem>>
    %56 = tpu.memref_squeeze %55 : memref<1x!tpu.dma_semaphore, #tpu.memory_space<semaphore_mem>> -> memref<!tpu.dma_semaphore, #tpu.memory_space<semaphore_mem>>
    tpu.enqueue_dma source(%52 : memref<128x128xbf16, #tpu.memory_space<any>>) target(%54 : memref<128x128xbf16, #tpu.memory_space<vmem>>) target_semaphore(%56 : memref<!tpu.dma_semaphore, #tpu.memory_space<semaphore_mem>>)
    %c2_i32_53 = arith.constant 2 : i32
    %c0_i32_54 = arith.constant 0 : i32
    %c0_i32_55 = arith.constant 0 : i32
    %c0_i32_56 = arith.constant 0 : i32
    %c0_i32_57 = arith.constant 0 : i32
    %57 = tpu.memref_slice %arg2[%c2_i32_53, %c0_i32_56, %c0_i32_57] : memref<11x128x128xbf16, #tpu.memory_space<any>> -> memref<1x128x128xbf16, #tpu.memory_space<any>>
    %58 = tpu.memref_squeeze %57 : memref<1x128x128xbf16, #tpu.memory_space<any>> -> memref<128x128xbf16, #tpu.memory_space<any>>
    %c0_i32_58 = arith.constant 0 : i32
    %c0_i32_59 = arith.constant 0 : i32
    %59 = tpu.memref_slice %arg4[%c0_i32_54, %c0_i32_58, %c0_i32_59] : memref<2x128x128xbf16, #tpu.memory_space<vmem>> -> memref<1x128x128xbf16, #tpu.memory_space<vmem>>
    %60 = tpu.memref_squeeze %59 : memref<1x128x128xbf16, #tpu.memory_space<vmem>> -> memref<128x128xbf16, #tpu.memory_space<vmem>>
    %61 = tpu.memref_slice %arg5[%c0_i32_55] : memref<2x!tpu.dma_semaphore, #tpu.memory_space<semaphore_mem>> -> memref<1x!tpu.dma_semaphore, #tpu.memory_space<semaphore_mem>>
    %62 = tpu.memref_squeeze %61 : memref<1x!tpu.dma_semaphore, #tpu.memory_space<semaphore_mem>> -> memref<!tpu.dma_semaphore, #tpu.memory_space<semaphore_mem>>
    tpu.wait_dma2 semaphore(%62 : memref<!tpu.dma_semaphore, #tpu.memory_space<semaphore_mem>>) src(%58 : memref<128x128xbf16, #tpu.memory_space<any>>) dst(%60 : memref<128x128xbf16, #tpu.memory_space<vmem>>)
    %63 = arith.truncf %50 : vector<8x128xf32> to vector<8x128xbf16>
    %c0_60 = arith.constant 0 : index
    %c0_61 = arith.constant 0 : index
    %c0_62 = arith.constant 0 : index
    %64 = vector.load %arg4[%c0_60, %c0_61, %c0_62] : memref<2x128x128xbf16, #tpu.memory_space<vmem>>, vector<1x128x128xbf16>
    %65 = vector.shape_cast %64 : vector<1x128x128xbf16> to vector<128x128xbf16>
    %cst_63 = arith.constant dense<0.000000e+00> : vector<8x128xf32>
    %66 = tpu.matmul %63, %65, %cst_63 {dimension_numbers = #tpu.dot_dimension_numbers<[1], [0], [0], [1], [0, 0, 1, 1], [], []>} : vector<8x128xbf16>, vector<128x128xbf16>, vector<8x128xf32> -> vector<8x128xf32>
    %c2 = arith.constant 2 : index
    %c0_64 = arith.constant 0 : index
    %c0_65 = arith.constant 0 : index
    %67 = vector.load %arg1[%c2, %c0_64, %c0_65] : memref<11x1x128xf32, #tpu.memory_space<vmem>>, vector<1x1x128xf32>
    %68 = vector.shape_cast %67 : vector<1x1x128xf32> to vector<1x128xf32>
    %69 = vector.broadcast %68 : vector<1x128xf32> to vector<8x128xf32>
    %70 = arith.addf %66, %69 : vector<8x128xf32>
    %cst_66 = arith.constant 0.000000e+00 : f32
    %71 = vector.broadcast %cst_66 : f32 to vector<8x128xf32>
    %72 = arith.maximumf %70, %71 : vector<8x128xf32>
    %c4_i32 = arith.constant 4 : i32
    %c0_i32_67 = arith.constant 0 : i32
    %c0_i32_68 = arith.constant 0 : i32
    %c0_i32_69 = arith.constant 0 : i32
    %c0_i32_70 = arith.constant 0 : i32
    %73 = tpu.memref_slice %arg2[%c4_i32, %c0_i32_69, %c0_i32_70] : memref<11x128x128xbf16, #tpu.memory_space<any>> -> memref<1x128x128xbf16, #tpu.memory_space<any>>
    %74 = tpu.memref_squeeze %73 : memref<1x128x128xbf16, #tpu.memory_space<any>> -> memref<128x128xbf16, #tpu.memory_space<any>>
    %c0_i32_71 = arith.constant 0 : i32
    %c0_i32_72 = arith.constant 0 : i32
    %75 = tpu.memref_slice %arg4[%c0_i32_67, %c0_i32_71, %c0_i32_72] : memref<2x128x128xbf16, #tpu.memory_space<vmem>> -> memref<1x128x128xbf16, #tpu.memory_space<vmem>>
    %76 = tpu.memref_squeeze %75 : memref<1x128x128xbf16, #tpu.memory_space<vmem>> -> memref<128x128xbf16, #tpu.memory_space<vmem>>
    %77 = tpu.memref_slice %arg5[%c0_i32_68] : memref<2x!tpu.dma_semaphore, #tpu.memory_space<semaphore_mem>> -> memref<1x!tpu.dma_semaphore, #tpu.memory_space<semaphore_mem>>
    %78 = tpu.memref_squeeze %77 : memref<1x!tpu.dma_semaphore, #tpu.memory_space<semaphore_mem>> -> memref<!tpu.dma_semaphore, #tpu.memory_space<semaphore_mem>>
    tpu.enqueue_dma source(%74 : memref<128x128xbf16, #tpu.memory_space<any>>) target(%76 : memref<128x128xbf16, #tpu.memory_space<vmem>>) target_semaphore(%78 : memref<!tpu.dma_semaphore, #tpu.memory_space<semaphore_mem>>)
    %c3_i32_73 = arith.constant 3 : i32
    %c1_i32_74 = arith.constant 1 : i32
    %c1_i32_75 = arith.constant 1 : i32
    %c0_i32_76 = arith.constant 0 : i32
    %c0_i32_77 = arith.constant 0 : i32
    %79 = tpu.memref_slice %arg2[%c3_i32_73, %c0_i32_76, %c0_i32_77] : memref<11x128x128xbf16, #tpu.memory_space<any>> -> memref<1x128x128xbf16, #tpu.memory_space<any>>
    %80 = tpu.memref_squeeze %79 : memref<1x128x128xbf16, #tpu.memory_space<any>> -> memref<128x128xbf16, #tpu.memory_space<any>>
    %c0_i32_78 = arith.constant 0 : i32
    %c0_i32_79 = arith.constant 0 : i32
    %81 = tpu.memref_slice %arg4[%c1_i32_74, %c0_i32_78, %c0_i32_79] : memref<2x128x128xbf16, #tpu.memory_space<vmem>> -> memref<1x128x128xbf16, #tpu.memory_space<vmem>>
    %82 = tpu.memref_squeeze %81 : memref<1x128x128xbf16, #tpu.memory_space<vmem>> -> memref<128x128xbf16, #tpu.memory_space<vmem>>
    %83 = tpu.memref_slice %arg5[%c1_i32_75] : memref<2x!tpu.dma_semaphore, #tpu.memory_space<semaphore_mem>> -> memref<1x!tpu.dma_semaphore, #tpu.memory_space<semaphore_mem>>
    %84 = tpu.memref_squeeze %83 : memref<1x!tpu.dma_semaphore, #tpu.memory_space<semaphore_mem>> -> memref<!tpu.dma_semaphore, #tpu.memory_space<semaphore_mem>>
    tpu.wait_dma2 semaphore(%84 : memref<!tpu.dma_semaphore, #tpu.memory_space<semaphore_mem>>) src(%80 : memref<128x128xbf16, #tpu.memory_space<any>>) dst(%82 : memref<128x128xbf16, #tpu.memory_space<vmem>>)
    %85 = arith.truncf %72 : vector<8x128xf32> to vector<8x128xbf16>
    %c1_80 = arith.constant 1 : index
    %c0_81 = arith.constant 0 : index
    %c0_82 = arith.constant 0 : index
    %86 = vector.load %arg4[%c1_80, %c0_81, %c0_82] : memref<2x128x128xbf16, #tpu.memory_space<vmem>>, vector<1x128x128xbf16>
    %87 = vector.shape_cast %86 : vector<1x128x128xbf16> to vector<128x128xbf16>
    %cst_83 = arith.constant dense<0.000000e+00> : vector<8x128xf32>
    %88 = tpu.matmul %85, %87, %cst_83 {dimension_numbers = #tpu.dot_dimension_numbers<[1], [0], [0], [1], [0, 0, 1, 1], [], []>} : vector<8x128xbf16>, vector<128x128xbf16>, vector<8x128xf32> -> vector<8x128xf32>
    %c3 = arith.constant 3 : index
    %c0_84 = arith.constant 0 : index
    %c0_85 = arith.constant 0 : index
    %89 = vector.load %arg1[%c3, %c0_84, %c0_85] : memref<11x1x128xf32, #tpu.memory_space<vmem>>, vector<1x1x128xf32>
    %90 = vector.shape_cast %89 : vector<1x1x128xf32> to vector<1x128xf32>
    %91 = vector.broadcast %90 : vector<1x128xf32> to vector<8x128xf32>
    %92 = arith.addf %88, %91 : vector<8x128xf32>
    %cst_86 = arith.constant 0.000000e+00 : f32
    %93 = vector.broadcast %cst_86 : f32 to vector<8x128xf32>
    %94 = arith.maximumf %92, %93 : vector<8x128xf32>
    %c5_i32 = arith.constant 5 : i32
    %c1_i32_87 = arith.constant 1 : i32
    %c1_i32_88 = arith.constant 1 : i32
    %c0_i32_89 = arith.constant 0 : i32
    %c0_i32_90 = arith.constant 0 : i32
    %95 = tpu.memref_slice %arg2[%c5_i32, %c0_i32_89, %c0_i32_90] : memref<11x128x128xbf16, #tpu.memory_space<any>> -> memref<1x128x128xbf16, #tpu.memory_space<any>>
    %96 = tpu.memref_squeeze %95 : memref<1x128x128xbf16, #tpu.memory_space<any>> -> memref<128x128xbf16, #tpu.memory_space<any>>
    %c0_i32_91 = arith.constant 0 : i32
    %c0_i32_92 = arith.constant 0 : i32
    %97 = tpu.memref_slice %arg4[%c1_i32_87, %c0_i32_91, %c0_i32_92] : memref<2x128x128xbf16, #tpu.memory_space<vmem>> -> memref<1x128x128xbf16, #tpu.memory_space<vmem>>
    %98 = tpu.memref_squeeze %97 : memref<1x128x128xbf16, #tpu.memory_space<vmem>> -> memref<128x128xbf16, #tpu.memory_space<vmem>>
    %99 = tpu.memref_slice %arg5[%c1_i32_88] : memref<2x!tpu.dma_semaphore, #tpu.memory_space<semaphore_mem>> -> memref<1x!tpu.dma_semaphore, #tpu.memory_space<semaphore_mem>>
    %100 = tpu.memref_squeeze %99 : memref<1x!tpu.dma_semaphore, #tpu.memory_space<semaphore_mem>> -> memref<!tpu.dma_semaphore, #tpu.memory_space<semaphore_mem>>
    tpu.enqueue_dma source(%96 : memref<128x128xbf16, #tpu.memory_space<any>>) target(%98 : memref<128x128xbf16, #tpu.memory_space<vmem>>) target_semaphore(%100 : memref<!tpu.dma_semaphore, #tpu.memory_space<semaphore_mem>>)
    %c4_i32_93 = arith.constant 4 : i32
    %c0_i32_94 = arith.constant 0 : i32
    %c0_i32_95 = arith.constant 0 : i32
    %c0_i32_96 = arith.constant 0 : i32
    %c0_i32_97 = arith.constant 0 : i32
    %101 = tpu.memref_slice %arg2[%c4_i32_93, %c0_i32_96, %c0_i32_97] : memref<11x128x128xbf16, #tpu.memory_space<any>> -> memref<1x128x128xbf16, #tpu.memory_space<any>>
    %102 = tpu.memref_squeeze %101 : memref<1x128x128xbf16, #tpu.memory_space<any>> -> memref<128x128xbf16, #tpu.memory_space<any>>
    %c0_i32_98 = arith.constant 0 : i32
    %c0_i32_99 = arith.constant 0 : i32
    %103 = tpu.memref_slice %arg4[%c0_i32_94, %c0_i32_98, %c0_i32_99] : memref<2x128x128xbf16, #tpu.memory_space<vmem>> -> memref<1x128x128xbf16, #tpu.memory_space<vmem>>
    %104 = tpu.memref_squeeze %103 : memref<1x128x128xbf16, #tpu.memory_space<vmem>> -> memref<128x128xbf16, #tpu.memory_space<vmem>>
    %105 = tpu.memref_slice %arg5[%c0_i32_95] : memref<2x!tpu.dma_semaphore, #tpu.memory_space<semaphore_mem>> -> memref<1x!tpu.dma_semaphore, #tpu.memory_space<semaphore_mem>>
    %106 = tpu.memref_squeeze %105 : memref<1x!tpu.dma_semaphore, #tpu.memory_space<semaphore_mem>> -> memref<!tpu.dma_semaphore, #tpu.memory_space<semaphore_mem>>
    tpu.wait_dma2 semaphore(%106 : memref<!tpu.dma_semaphore, #tpu.memory_space<semaphore_mem>>) src(%102 : memref<128x128xbf16, #tpu.memory_space<any>>) dst(%104 : memref<128x128xbf16, #tpu.memory_space<vmem>>)
    %107 = arith.truncf %94 : vector<8x128xf32> to vector<8x128xbf16>
    %c0_100 = arith.constant 0 : index
    %c0_101 = arith.constant 0 : index
    %c0_102 = arith.constant 0 : index
    %108 = vector.load %arg4[%c0_100, %c0_101, %c0_102] : memref<2x128x128xbf16, #tpu.memory_space<vmem>>, vector<1x128x128xbf16>
    %109 = vector.shape_cast %108 : vector<1x128x128xbf16> to vector<128x128xbf16>
    %cst_103 = arith.constant dense<0.000000e+00> : vector<8x128xf32>
    %110 = tpu.matmul %107, %109, %cst_103 {dimension_numbers = #tpu.dot_dimension_numbers<[1], [0], [0], [1], [0, 0, 1, 1], [], []>} : vector<8x128xbf16>, vector<128x128xbf16>, vector<8x128xf32> -> vector<8x128xf32>
    %c4 = arith.constant 4 : index
    %c0_104 = arith.constant 0 : index
    %c0_105 = arith.constant 0 : index
    %111 = vector.load %arg1[%c4, %c0_104, %c0_105] : memref<11x1x128xf32, #tpu.memory_space<vmem>>, vector<1x1x128xf32>
    %112 = vector.shape_cast %111 : vector<1x1x128xf32> to vector<1x128xf32>
    %113 = vector.broadcast %112 : vector<1x128xf32> to vector<8x128xf32>
    %114 = arith.addf %110, %113 : vector<8x128xf32>
    %cst_106 = arith.constant 0.000000e+00 : f32
    %115 = vector.broadcast %cst_106 : f32 to vector<8x128xf32>
    %116 = arith.maximumf %114, %115 : vector<8x128xf32>
    %c6_i32 = arith.constant 6 : i32
    %c0_i32_107 = arith.constant 0 : i32
    %c0_i32_108 = arith.constant 0 : i32
    %c0_i32_109 = arith.constant 0 : i32
    %c0_i32_110 = arith.constant 0 : i32
    %117 = tpu.memref_slice %arg2[%c6_i32, %c0_i32_109, %c0_i32_110] : memref<11x128x128xbf16, #tpu.memory_space<any>> -> memref<1x128x128xbf16, #tpu.memory_space<any>>
    %118 = tpu.memref_squeeze %117 : memref<1x128x128xbf16, #tpu.memory_space<any>> -> memref<128x128xbf16, #tpu.memory_space<any>>
    %c0_i32_111 = arith.constant 0 : i32
    %c0_i32_112 = arith.constant 0 : i32
    %119 = tpu.memref_slice %arg4[%c0_i32_107, %c0_i32_111, %c0_i32_112] : memref<2x128x128xbf16, #tpu.memory_space<vmem>> -> memref<1x128x128xbf16, #tpu.memory_space<vmem>>
    %120 = tpu.memref_squeeze %119 : memref<1x128x128xbf16, #tpu.memory_space<vmem>> -> memref<128x128xbf16, #tpu.memory_space<vmem>>
    %121 = tpu.memref_slice %arg5[%c0_i32_108] : memref<2x!tpu.dma_semaphore, #tpu.memory_space<semaphore_mem>> -> memref<1x!tpu.dma_semaphore, #tpu.memory_space<semaphore_mem>>
    %122 = tpu.memref_squeeze %121 : memref<1x!tpu.dma_semaphore, #tpu.memory_space<semaphore_mem>> -> memref<!tpu.dma_semaphore, #tpu.memory_space<semaphore_mem>>
    tpu.enqueue_dma source(%118 : memref<128x128xbf16, #tpu.memory_space<any>>) target(%120 : memref<128x128xbf16, #tpu.memory_space<vmem>>) target_semaphore(%122 : memref<!tpu.dma_semaphore, #tpu.memory_space<semaphore_mem>>)
    %c5_i32_113 = arith.constant 5 : i32
    %c1_i32_114 = arith.constant 1 : i32
    %c1_i32_115 = arith.constant 1 : i32
    %c0_i32_116 = arith.constant 0 : i32
    %c0_i32_117 = arith.constant 0 : i32
    %123 = tpu.memref_slice %arg2[%c5_i32_113, %c0_i32_116, %c0_i32_117] : memref<11x128x128xbf16, #tpu.memory_space<any>> -> memref<1x128x128xbf16, #tpu.memory_space<any>>
    %124 = tpu.memref_squeeze %123 : memref<1x128x128xbf16, #tpu.memory_space<any>> -> memref<128x128xbf16, #tpu.memory_space<any>>
    %c0_i32_118 = arith.constant 0 : i32
    %c0_i32_119 = arith.constant 0 : i32
    %125 = tpu.memref_slice %arg4[%c1_i32_114, %c0_i32_118, %c0_i32_119] : memref<2x128x128xbf16, #tpu.memory_space<vmem>> -> memref<1x128x128xbf16, #tpu.memory_space<vmem>>
    %126 = tpu.memref_squeeze %125 : memref<1x128x128xbf16, #tpu.memory_space<vmem>> -> memref<128x128xbf16, #tpu.memory_space<vmem>>
    %127 = tpu.memref_slice %arg5[%c1_i32_115] : memref<2x!tpu.dma_semaphore, #tpu.memory_space<semaphore_mem>> -> memref<1x!tpu.dma_semaphore, #tpu.memory_space<semaphore_mem>>
    %128 = tpu.memref_squeeze %127 : memref<1x!tpu.dma_semaphore, #tpu.memory_space<semaphore_mem>> -> memref<!tpu.dma_semaphore, #tpu.memory_space<semaphore_mem>>
    tpu.wait_dma2 semaphore(%128 : memref<!tpu.dma_semaphore, #tpu.memory_space<semaphore_mem>>) src(%124 : memref<128x128xbf16, #tpu.memory_space<any>>) dst(%126 : memref<128x128xbf16, #tpu.memory_space<vmem>>)
    %129 = arith.truncf %116 : vector<8x128xf32> to vector<8x128xbf16>
    %c1_120 = arith.constant 1 : index
    %c0_121 = arith.constant 0 : index
    %c0_122 = arith.constant 0 : index
    %130 = vector.load %arg4[%c1_120, %c0_121, %c0_122] : memref<2x128x128xbf16, #tpu.memory_space<vmem>>, vector<1x128x128xbf16>
    %131 = vector.shape_cast %130 : vector<1x128x128xbf16> to vector<128x128xbf16>
    %cst_123 = arith.constant dense<0.000000e+00> : vector<8x128xf32>
    %132 = tpu.matmul %129, %131, %cst_123 {dimension_numbers = #tpu.dot_dimension_numbers<[1], [0], [0], [1], [0, 0, 1, 1], [], []>} : vector<8x128xbf16>, vector<128x128xbf16>, vector<8x128xf32> -> vector<8x128xf32>
    %c5 = arith.constant 5 : index
    %c0_124 = arith.constant 0 : index
    %c0_125 = arith.constant 0 : index
    %133 = vector.load %arg1[%c5, %c0_124, %c0_125] : memref<11x1x128xf32, #tpu.memory_space<vmem>>, vector<1x1x128xf32>
    %134 = vector.shape_cast %133 : vector<1x1x128xf32> to vector<1x128xf32>
    %135 = vector.broadcast %134 : vector<1x128xf32> to vector<8x128xf32>
    %136 = arith.addf %132, %135 : vector<8x128xf32>
    %cst_126 = arith.constant 0.000000e+00 : f32
    %137 = vector.broadcast %cst_126 : f32 to vector<8x128xf32>
    %138 = arith.maximumf %136, %137 : vector<8x128xf32>
    %c7_i32 = arith.constant 7 : i32
    %c1_i32_127 = arith.constant 1 : i32
    %c1_i32_128 = arith.constant 1 : i32
    %c0_i32_129 = arith.constant 0 : i32
    %c0_i32_130 = arith.constant 0 : i32
    %139 = tpu.memref_slice %arg2[%c7_i32, %c0_i32_129, %c0_i32_130] : memref<11x128x128xbf16, #tpu.memory_space<any>> -> memref<1x128x128xbf16, #tpu.memory_space<any>>
    %140 = tpu.memref_squeeze %139 : memref<1x128x128xbf16, #tpu.memory_space<any>> -> memref<128x128xbf16, #tpu.memory_space<any>>
    %c0_i32_131 = arith.constant 0 : i32
    %c0_i32_132 = arith.constant 0 : i32
    %141 = tpu.memref_slice %arg4[%c1_i32_127, %c0_i32_131, %c0_i32_132] : memref<2x128x128xbf16, #tpu.memory_space<vmem>> -> memref<1x128x128xbf16, #tpu.memory_space<vmem>>
    %142 = tpu.memref_squeeze %141 : memref<1x128x128xbf16, #tpu.memory_space<vmem>> -> memref<128x128xbf16, #tpu.memory_space<vmem>>
    %143 = tpu.memref_slice %arg5[%c1_i32_128] : memref<2x!tpu.dma_semaphore, #tpu.memory_space<semaphore_mem>> -> memref<1x!tpu.dma_semaphore, #tpu.memory_space<semaphore_mem>>
    %144 = tpu.memref_squeeze %143 : memref<1x!tpu.dma_semaphore, #tpu.memory_space<semaphore_mem>> -> memref<!tpu.dma_semaphore, #tpu.memory_space<semaphore_mem>>
    tpu.enqueue_dma source(%140 : memref<128x128xbf16, #tpu.memory_space<any>>) target(%142 : memref<128x128xbf16, #tpu.memory_space<vmem>>) target_semaphore(%144 : memref<!tpu.dma_semaphore, #tpu.memory_space<semaphore_mem>>)
    %c6_i32_133 = arith.constant 6 : i32
    %c0_i32_134 = arith.constant 0 : i32
    %c0_i32_135 = arith.constant 0 : i32
    %c0_i32_136 = arith.constant 0 : i32
    %c0_i32_137 = arith.constant 0 : i32
    %145 = tpu.memref_slice %arg2[%c6_i32_133, %c0_i32_136, %c0_i32_137] : memref<11x128x128xbf16, #tpu.memory_space<any>> -> memref<1x128x128xbf16, #tpu.memory_space<any>>
    %146 = tpu.memref_squeeze %145 : memref<1x128x128xbf16, #tpu.memory_space<any>> -> memref<128x128xbf16, #tpu.memory_space<any>>
    %c0_i32_138 = arith.constant 0 : i32
    %c0_i32_139 = arith.constant 0 : i32
    %147 = tpu.memref_slice %arg4[%c0_i32_134, %c0_i32_138, %c0_i32_139] : memref<2x128x128xbf16, #tpu.memory_space<vmem>> -> memref<1x128x128xbf16, #tpu.memory_space<vmem>>
    %148 = tpu.memref_squeeze %147 : memref<1x128x128xbf16, #tpu.memory_space<vmem>> -> memref<128x128xbf16, #tpu.memory_space<vmem>>
    %149 = tpu.memref_slice %arg5[%c0_i32_135] : memref<2x!tpu.dma_semaphore, #tpu.memory_space<semaphore_mem>> -> memref<1x!tpu.dma_semaphore, #tpu.memory_space<semaphore_mem>>
    %150 = tpu.memref_squeeze %149 : memref<1x!tpu.dma_semaphore, #tpu.memory_space<semaphore_mem>> -> memref<!tpu.dma_semaphore, #tpu.memory_space<semaphore_mem>>
    tpu.wait_dma2 semaphore(%150 : memref<!tpu.dma_semaphore, #tpu.memory_space<semaphore_mem>>) src(%146 : memref<128x128xbf16, #tpu.memory_space<any>>) dst(%148 : memref<128x128xbf16, #tpu.memory_space<vmem>>)
    %151 = arith.truncf %138 : vector<8x128xf32> to vector<8x128xbf16>
    %c0_140 = arith.constant 0 : index
    %c0_141 = arith.constant 0 : index
    %c0_142 = arith.constant 0 : index
    %152 = vector.load %arg4[%c0_140, %c0_141, %c0_142] : memref<2x128x128xbf16, #tpu.memory_space<vmem>>, vector<1x128x128xbf16>
    %153 = vector.shape_cast %152 : vector<1x128x128xbf16> to vector<128x128xbf16>
    %cst_143 = arith.constant dense<0.000000e+00> : vector<8x128xf32>
    %154 = tpu.matmul %151, %153, %cst_143 {dimension_numbers = #tpu.dot_dimension_numbers<[1], [0], [0], [1], [0, 0, 1, 1], [], []>} : vector<8x128xbf16>, vector<128x128xbf16>, vector<8x128xf32> -> vector<8x128xf32>
    %c6 = arith.constant 6 : index
    %c0_144 = arith.constant 0 : index
    %c0_145 = arith.constant 0 : index
    %155 = vector.load %arg1[%c6, %c0_144, %c0_145] : memref<11x1x128xf32, #tpu.memory_space<vmem>>, vector<1x1x128xf32>
    %156 = vector.shape_cast %155 : vector<1x1x128xf32> to vector<1x128xf32>
    %157 = vector.broadcast %156 : vector<1x128xf32> to vector<8x128xf32>
    %158 = arith.addf %154, %157 : vector<8x128xf32>
    %cst_146 = arith.constant 0.000000e+00 : f32
    %159 = vector.broadcast %cst_146 : f32 to vector<8x128xf32>
    %160 = arith.maximumf %158, %159 : vector<8x128xf32>
    %c8_i32 = arith.constant 8 : i32
    %c0_i32_147 = arith.constant 0 : i32
    %c0_i32_148 = arith.constant 0 : i32
    %c0_i32_149 = arith.constant 0 : i32
    %c0_i32_150 = arith.constant 0 : i32
    %161 = tpu.memref_slice %arg2[%c8_i32, %c0_i32_149, %c0_i32_150] : memref<11x128x128xbf16, #tpu.memory_space<any>> -> memref<1x128x128xbf16, #tpu.memory_space<any>>
    %162 = tpu.memref_squeeze %161 : memref<1x128x128xbf16, #tpu.memory_space<any>> -> memref<128x128xbf16, #tpu.memory_space<any>>
    %c0_i32_151 = arith.constant 0 : i32
    %c0_i32_152 = arith.constant 0 : i32
    %163 = tpu.memref_slice %arg4[%c0_i32_147, %c0_i32_151, %c0_i32_152] : memref<2x128x128xbf16, #tpu.memory_space<vmem>> -> memref<1x128x128xbf16, #tpu.memory_space<vmem>>
    %164 = tpu.memref_squeeze %163 : memref<1x128x128xbf16, #tpu.memory_space<vmem>> -> memref<128x128xbf16, #tpu.memory_space<vmem>>
    %165 = tpu.memref_slice %arg5[%c0_i32_148] : memref<2x!tpu.dma_semaphore, #tpu.memory_space<semaphore_mem>> -> memref<1x!tpu.dma_semaphore, #tpu.memory_space<semaphore_mem>>
    %166 = tpu.memref_squeeze %165 : memref<1x!tpu.dma_semaphore, #tpu.memory_space<semaphore_mem>> -> memref<!tpu.dma_semaphore, #tpu.memory_space<semaphore_mem>>
    tpu.enqueue_dma source(%162 : memref<128x128xbf16, #tpu.memory_space<any>>) target(%164 : memref<128x128xbf16, #tpu.memory_space<vmem>>) target_semaphore(%166 : memref<!tpu.dma_semaphore, #tpu.memory_space<semaphore_mem>>)
    %c7_i32_153 = arith.constant 7 : i32
    %c1_i32_154 = arith.constant 1 : i32
    %c1_i32_155 = arith.constant 1 : i32
    %c0_i32_156 = arith.constant 0 : i32
    %c0_i32_157 = arith.constant 0 : i32
    %167 = tpu.memref_slice %arg2[%c7_i32_153, %c0_i32_156, %c0_i32_157] : memref<11x128x128xbf16, #tpu.memory_space<any>> -> memref<1x128x128xbf16, #tpu.memory_space<any>>
    %168 = tpu.memref_squeeze %167 : memref<1x128x128xbf16, #tpu.memory_space<any>> -> memref<128x128xbf16, #tpu.memory_space<any>>
    %c0_i32_158 = arith.constant 0 : i32
    %c0_i32_159 = arith.constant 0 : i32
    %169 = tpu.memref_slice %arg4[%c1_i32_154, %c0_i32_158, %c0_i32_159] : memref<2x128x128xbf16, #tpu.memory_space<vmem>> -> memref<1x128x128xbf16, #tpu.memory_space<vmem>>
    %170 = tpu.memref_squeeze %169 : memref<1x128x128xbf16, #tpu.memory_space<vmem>> -> memref<128x128xbf16, #tpu.memory_space<vmem>>
    %171 = tpu.memref_slice %arg5[%c1_i32_155] : memref<2x!tpu.dma_semaphore, #tpu.memory_space<semaphore_mem>> -> memref<1x!tpu.dma_semaphore, #tpu.memory_space<semaphore_mem>>
    %172 = tpu.memref_squeeze %171 : memref<1x!tpu.dma_semaphore, #tpu.memory_space<semaphore_mem>> -> memref<!tpu.dma_semaphore, #tpu.memory_space<semaphore_mem>>
    tpu.wait_dma2 semaphore(%172 : memref<!tpu.dma_semaphore, #tpu.memory_space<semaphore_mem>>) src(%168 : memref<128x128xbf16, #tpu.memory_space<any>>) dst(%170 : memref<128x128xbf16, #tpu.memory_space<vmem>>)
    %173 = arith.truncf %160 : vector<8x128xf32> to vector<8x128xbf16>
    %c1_160 = arith.constant 1 : index
    %c0_161 = arith.constant 0 : index
    %c0_162 = arith.constant 0 : index
    %174 = vector.load %arg4[%c1_160, %c0_161, %c0_162] : memref<2x128x128xbf16, #tpu.memory_space<vmem>>, vector<1x128x128xbf16>
    %175 = vector.shape_cast %174 : vector<1x128x128xbf16> to vector<128x128xbf16>
    %cst_163 = arith.constant dense<0.000000e+00> : vector<8x128xf32>
    %176 = tpu.matmul %173, %175, %cst_163 {dimension_numbers = #tpu.dot_dimension_numbers<[1], [0], [0], [1], [0, 0, 1, 1], [], []>} : vector<8x128xbf16>, vector<128x128xbf16>, vector<8x128xf32> -> vector<8x128xf32>
    %c7 = arith.constant 7 : index
    %c0_164 = arith.constant 0 : index
    %c0_165 = arith.constant 0 : index
    %177 = vector.load %arg1[%c7, %c0_164, %c0_165] : memref<11x1x128xf32, #tpu.memory_space<vmem>>, vector<1x1x128xf32>
    %178 = vector.shape_cast %177 : vector<1x1x128xf32> to vector<1x128xf32>
    %179 = vector.broadcast %178 : vector<1x128xf32> to vector<8x128xf32>
    %180 = arith.addf %176, %179 : vector<8x128xf32>
    %cst_166 = arith.constant 0.000000e+00 : f32
    %181 = vector.broadcast %cst_166 : f32 to vector<8x128xf32>
    %182 = arith.maximumf %180, %181 : vector<8x128xf32>
    %c9_i32 = arith.constant 9 : i32
    %c1_i32_167 = arith.constant 1 : i32
    %c1_i32_168 = arith.constant 1 : i32
    %c0_i32_169 = arith.constant 0 : i32
    %c0_i32_170 = arith.constant 0 : i32
    %183 = tpu.memref_slice %arg2[%c9_i32, %c0_i32_169, %c0_i32_170] : memref<11x128x128xbf16, #tpu.memory_space<any>> -> memref<1x128x128xbf16, #tpu.memory_space<any>>
    %184 = tpu.memref_squeeze %183 : memref<1x128x128xbf16, #tpu.memory_space<any>> -> memref<128x128xbf16, #tpu.memory_space<any>>
    %c0_i32_171 = arith.constant 0 : i32
    %c0_i32_172 = arith.constant 0 : i32
    %185 = tpu.memref_slice %arg4[%c1_i32_167, %c0_i32_171, %c0_i32_172] : memref<2x128x128xbf16, #tpu.memory_space<vmem>> -> memref<1x128x128xbf16, #tpu.memory_space<vmem>>
    %186 = tpu.memref_squeeze %185 : memref<1x128x128xbf16, #tpu.memory_space<vmem>> -> memref<128x128xbf16, #tpu.memory_space<vmem>>
    %187 = tpu.memref_slice %arg5[%c1_i32_168] : memref<2x!tpu.dma_semaphore, #tpu.memory_space<semaphore_mem>> -> memref<1x!tpu.dma_semaphore, #tpu.memory_space<semaphore_mem>>
    %188 = tpu.memref_squeeze %187 : memref<1x!tpu.dma_semaphore, #tpu.memory_space<semaphore_mem>> -> memref<!tpu.dma_semaphore, #tpu.memory_space<semaphore_mem>>
    tpu.enqueue_dma source(%184 : memref<128x128xbf16, #tpu.memory_space<any>>) target(%186 : memref<128x128xbf16, #tpu.memory_space<vmem>>) target_semaphore(%188 : memref<!tpu.dma_semaphore, #tpu.memory_space<semaphore_mem>>)
    %c8_i32_173 = arith.constant 8 : i32
    %c0_i32_174 = arith.constant 0 : i32
    %c0_i32_175 = arith.constant 0 : i32
    %c0_i32_176 = arith.constant 0 : i32
    %c0_i32_177 = arith.constant 0 : i32
    %189 = tpu.memref_slice %arg2[%c8_i32_173, %c0_i32_176, %c0_i32_177] : memref<11x128x128xbf16, #tpu.memory_space<any>> -> memref<1x128x128xbf16, #tpu.memory_space<any>>
    %190 = tpu.memref_squeeze %189 : memref<1x128x128xbf16, #tpu.memory_space<any>> -> memref<128x128xbf16, #tpu.memory_space<any>>
    %c0_i32_178 = arith.constant 0 : i32
    %c0_i32_179 = arith.constant 0 : i32
    %191 = tpu.memref_slice %arg4[%c0_i32_174, %c0_i32_178, %c0_i32_179] : memref<2x128x128xbf16, #tpu.memory_space<vmem>> -> memref<1x128x128xbf16, #tpu.memory_space<vmem>>
    %192 = tpu.memref_squeeze %191 : memref<1x128x128xbf16, #tpu.memory_space<vmem>> -> memref<128x128xbf16, #tpu.memory_space<vmem>>
    %193 = tpu.memref_slice %arg5[%c0_i32_175] : memref<2x!tpu.dma_semaphore, #tpu.memory_space<semaphore_mem>> -> memref<1x!tpu.dma_semaphore, #tpu.memory_space<semaphore_mem>>
    %194 = tpu.memref_squeeze %193 : memref<1x!tpu.dma_semaphore, #tpu.memory_space<semaphore_mem>> -> memref<!tpu.dma_semaphore, #tpu.memory_space<semaphore_mem>>
    tpu.wait_dma2 semaphore(%194 : memref<!tpu.dma_semaphore, #tpu.memory_space<semaphore_mem>>) src(%190 : memref<128x128xbf16, #tpu.memory_space<any>>) dst(%192 : memref<128x128xbf16, #tpu.memory_space<vmem>>)
    %195 = arith.truncf %182 : vector<8x128xf32> to vector<8x128xbf16>
    %c0_180 = arith.constant 0 : index
    %c0_181 = arith.constant 0 : index
    %c0_182 = arith.constant 0 : index
    %196 = vector.load %arg4[%c0_180, %c0_181, %c0_182] : memref<2x128x128xbf16, #tpu.memory_space<vmem>>, vector<1x128x128xbf16>
    %197 = vector.shape_cast %196 : vector<1x128x128xbf16> to vector<128x128xbf16>
    %cst_183 = arith.constant dense<0.000000e+00> : vector<8x128xf32>
    %198 = tpu.matmul %195, %197, %cst_183 {dimension_numbers = #tpu.dot_dimension_numbers<[1], [0], [0], [1], [0, 0, 1, 1], [], []>} : vector<8x128xbf16>, vector<128x128xbf16>, vector<8x128xf32> -> vector<8x128xf32>
    %c8 = arith.constant 8 : index
    %c0_184 = arith.constant 0 : index
    %c0_185 = arith.constant 0 : index
    %199 = vector.load %arg1[%c8, %c0_184, %c0_185] : memref<11x1x128xf32, #tpu.memory_space<vmem>>, vector<1x1x128xf32>
    %200 = vector.shape_cast %199 : vector<1x1x128xf32> to vector<1x128xf32>
    %201 = vector.broadcast %200 : vector<1x128xf32> to vector<8x128xf32>
    %202 = arith.addf %198, %201 : vector<8x128xf32>
    %cst_186 = arith.constant 0.000000e+00 : f32
    %203 = vector.broadcast %cst_186 : f32 to vector<8x128xf32>
    %204 = arith.maximumf %202, %203 : vector<8x128xf32>
    %c10_i32 = arith.constant 10 : i32
    %c0_i32_187 = arith.constant 0 : i32
    %c0_i32_188 = arith.constant 0 : i32
    %c0_i32_189 = arith.constant 0 : i32
    %c0_i32_190 = arith.constant 0 : i32
    %205 = tpu.memref_slice %arg2[%c10_i32, %c0_i32_189, %c0_i32_190] : memref<11x128x128xbf16, #tpu.memory_space<any>> -> memref<1x128x128xbf16, #tpu.memory_space<any>>
    %206 = tpu.memref_squeeze %205 : memref<1x128x128xbf16, #tpu.memory_space<any>> -> memref<128x128xbf16, #tpu.memory_space<any>>
    %c0_i32_191 = arith.constant 0 : i32
    %c0_i32_192 = arith.constant 0 : i32
    %207 = tpu.memref_slice %arg4[%c0_i32_187, %c0_i32_191, %c0_i32_192] : memref<2x128x128xbf16, #tpu.memory_space<vmem>> -> memref<1x128x128xbf16, #tpu.memory_space<vmem>>
    %208 = tpu.memref_squeeze %207 : memref<1x128x128xbf16, #tpu.memory_space<vmem>> -> memref<128x128xbf16, #tpu.memory_space<vmem>>
    %209 = tpu.memref_slice %arg5[%c0_i32_188] : memref<2x!tpu.dma_semaphore, #tpu.memory_space<semaphore_mem>> -> memref<1x!tpu.dma_semaphore, #tpu.memory_space<semaphore_mem>>
    %210 = tpu.memref_squeeze %209 : memref<1x!tpu.dma_semaphore, #tpu.memory_space<semaphore_mem>> -> memref<!tpu.dma_semaphore, #tpu.memory_space<semaphore_mem>>
    tpu.enqueue_dma source(%206 : memref<128x128xbf16, #tpu.memory_space<any>>) target(%208 : memref<128x128xbf16, #tpu.memory_space<vmem>>) target_semaphore(%210 : memref<!tpu.dma_semaphore, #tpu.memory_space<semaphore_mem>>)
    %c9_i32_193 = arith.constant 9 : i32
    %c1_i32_194 = arith.constant 1 : i32
    %c1_i32_195 = arith.constant 1 : i32
    %c0_i32_196 = arith.constant 0 : i32
    %c0_i32_197 = arith.constant 0 : i32
    %211 = tpu.memref_slice %arg2[%c9_i32_193, %c0_i32_196, %c0_i32_197] : memref<11x128x128xbf16, #tpu.memory_space<any>> -> memref<1x128x128xbf16, #tpu.memory_space<any>>
    %212 = tpu.memref_squeeze %211 : memref<1x128x128xbf16, #tpu.memory_space<any>> -> memref<128x128xbf16, #tpu.memory_space<any>>
    %c0_i32_198 = arith.constant 0 : i32
    %c0_i32_199 = arith.constant 0 : i32
    %213 = tpu.memref_slice %arg4[%c1_i32_194, %c0_i32_198, %c0_i32_199] : memref<2x128x128xbf16, #tpu.memory_space<vmem>> -> memref<1x128x128xbf16, #tpu.memory_space<vmem>>
    %214 = tpu.memref_squeeze %213 : memref<1x128x128xbf16, #tpu.memory_space<vmem>> -> memref<128x128xbf16, #tpu.memory_space<vmem>>
    %215 = tpu.memref_slice %arg5[%c1_i32_195] : memref<2x!tpu.dma_semaphore, #tpu.memory_space<semaphore_mem>> -> memref<1x!tpu.dma_semaphore, #tpu.memory_space<semaphore_mem>>
    %216 = tpu.memref_squeeze %215 : memref<1x!tpu.dma_semaphore, #tpu.memory_space<semaphore_mem>> -> memref<!tpu.dma_semaphore, #tpu.memory_space<semaphore_mem>>
    tpu.wait_dma2 semaphore(%216 : memref<!tpu.dma_semaphore, #tpu.memory_space<semaphore_mem>>) src(%212 : memref<128x128xbf16, #tpu.memory_space<any>>) dst(%214 : memref<128x128xbf16, #tpu.memory_space<vmem>>)
    %217 = arith.truncf %204 : vector<8x128xf32> to vector<8x128xbf16>
    %c1_200 = arith.constant 1 : index
    %c0_201 = arith.constant 0 : index
    %c0_202 = arith.constant 0 : index
    %218 = vector.load %arg4[%c1_200, %c0_201, %c0_202] : memref<2x128x128xbf16, #tpu.memory_space<vmem>>, vector<1x128x128xbf16>
    %219 = vector.shape_cast %218 : vector<1x128x128xbf16> to vector<128x128xbf16>
    %cst_203 = arith.constant dense<0.000000e+00> : vector<8x128xf32>
    %220 = tpu.matmul %217, %219, %cst_203 {dimension_numbers = #tpu.dot_dimension_numbers<[1], [0], [0], [1], [0, 0, 1, 1], [], []>} : vector<8x128xbf16>, vector<128x128xbf16>, vector<8x128xf32> -> vector<8x128xf32>
    %c9 = arith.constant 9 : index
    %c0_204 = arith.constant 0 : index
    %c0_205 = arith.constant 0 : index
    %221 = vector.load %arg1[%c9, %c0_204, %c0_205] : memref<11x1x128xf32, #tpu.memory_space<vmem>>, vector<1x1x128xf32>
    %222 = vector.shape_cast %221 : vector<1x1x128xf32> to vector<1x128xf32>
    %223 = vector.broadcast %222 : vector<1x128xf32> to vector<8x128xf32>
    %224 = arith.addf %220, %223 : vector<8x128xf32>
    %cst_206 = arith.constant 0.000000e+00 : f32
    %225 = vector.broadcast %cst_206 : f32 to vector<8x128xf32>
    %226 = arith.maximumf %224, %225 : vector<8x128xf32>
    %c10_i32_207 = arith.constant 10 : i32
    %c0_i32_208 = arith.constant 0 : i32
    %c0_i32_209 = arith.constant 0 : i32
    %c0_i32_210 = arith.constant 0 : i32
    %c0_i32_211 = arith.constant 0 : i32
    %227 = tpu.memref_slice %arg2[%c10_i32_207, %c0_i32_210, %c0_i32_211] : memref<11x128x128xbf16, #tpu.memory_space<any>> -> memref<1x128x128xbf16, #tpu.memory_space<any>>
    %228 = tpu.memref_squeeze %227 : memref<1x128x128xbf16, #tpu.memory_space<any>> -> memref<128x128xbf16, #tpu.memory_space<any>>
    %c0_i32_212 = arith.constant 0 : i32
    %c0_i32_213 = arith.constant 0 : i32
    %229 = tpu.memref_slice %arg4[%c0_i32_208, %c0_i32_212, %c0_i32_213] : memref<2x128x128xbf16, #tpu.memory_space<vmem>> -> memref<1x128x128xbf16, #tpu.memory_space<vmem>>
    %230 = tpu.memref_squeeze %229 : memref<1x128x128xbf16, #tpu.memory_space<vmem>> -> memref<128x128xbf16, #tpu.memory_space<vmem>>
    %231 = tpu.memref_slice %arg5[%c0_i32_209] : memref<2x!tpu.dma_semaphore, #tpu.memory_space<semaphore_mem>> -> memref<1x!tpu.dma_semaphore, #tpu.memory_space<semaphore_mem>>
    %232 = tpu.memref_squeeze %231 : memref<1x!tpu.dma_semaphore, #tpu.memory_space<semaphore_mem>> -> memref<!tpu.dma_semaphore, #tpu.memory_space<semaphore_mem>>
    tpu.wait_dma2 semaphore(%232 : memref<!tpu.dma_semaphore, #tpu.memory_space<semaphore_mem>>) src(%228 : memref<128x128xbf16, #tpu.memory_space<any>>) dst(%230 : memref<128x128xbf16, #tpu.memory_space<vmem>>)
    %233 = arith.truncf %226 : vector<8x128xf32> to vector<8x128xbf16>
    %c0_214 = arith.constant 0 : index
    %c0_215 = arith.constant 0 : index
    %c0_216 = arith.constant 0 : index
    %234 = vector.load %arg4[%c0_214, %c0_215, %c0_216] : memref<2x128x128xbf16, #tpu.memory_space<vmem>>, vector<1x128x128xbf16>
    %235 = vector.shape_cast %234 : vector<1x128x128xbf16> to vector<128x128xbf16>
    %cst_217 = arith.constant dense<0.000000e+00> : vector<8x128xf32>
    %236 = tpu.matmul %233, %235, %cst_217 {dimension_numbers = #tpu.dot_dimension_numbers<[1], [0], [0], [1], [0, 0, 1, 1], [], []>} : vector<8x128xbf16>, vector<128x128xbf16>, vector<8x128xf32> -> vector<8x128xf32>
    %c10 = arith.constant 10 : index
    %c0_218 = arith.constant 0 : index
    %c0_219 = arith.constant 0 : index
    %237 = vector.load %arg1[%c10, %c0_218, %c0_219] : memref<11x1x128xf32, #tpu.memory_space<vmem>>, vector<1x1x128xf32>
    %238 = vector.shape_cast %237 : vector<1x1x128xf32> to vector<1x128xf32>
    %239 = vector.broadcast %238 : vector<1x128xf32> to vector<8x128xf32>
    %240 = arith.addf %236, %239 : vector<8x128xf32>
    %c0_220 = arith.constant 0 : index
    %c0_221 = arith.constant 0 : index
    %241 = vector.load %arg3[%c0_220, %c0_221] : memref<8x128xf32, #tpu.memory_space<vmem>>, vector<8x128xf32>
    tpu.vector_store %arg3[%c0_220, %c0_221], %240 {strides = array<i32>} : memref<8x128xf32, #tpu.memory_space<vmem>>, vector<8x128xf32>,
    return
  }
}

</mosaic_0001>

<llo_original>
// kernel: neural_net02_forward.1
$region0: #{neural_net02_forward.1}
  #allocation0 [shape = 'u32[]', space=smem, size = 0x4, offset = 0x4, fixed_abs, tag = 'smem constant byte address 0x4 - core index']
  #allocation1 [shape = 'u32[144,128]{1,0:T(1,128)}', space=vmem, size = 0x12000, scoped, tag = 'internal scratch']
  #allocation2 [shape = 'bf16[2,128,128]{2,1,0:T(8,128)(2,1)}', space=vmem, size = 0x10000, scoped, tag = 'scratch operand']
  #allocation3 [shape = 's32[2]{0}', space=sflag, size = 0x8, scoped, tag = 'scratch operand']
  #allocation6 [shape = 's32[]', space=sflag, size = 0x4, offset = 0, fixed_abs, tag = 'sflag constant byte address 0x0 - dummy sync flag']
  #allocation7 [shape = 's32[]', space=sflag, size = 0x4, offset = 0, fixed_abs, tag = 'sflag constant byte address 0x0 - dummy sync flag']
  #allocation8 [shape = 'u32[]', space=smem, size = 0x4, offset = 0x44, fixed_abs, tag = 'smem constant byte address 0x44 - assertion arg 0']
  #allocation9 [shape = 'u32[]', space=smem, size = 0x4, offset = 0x48, fixed_abs, tag = 'smem constant byte address 0x48 - assertion arg 1']
  #allocation10 [shape = 's32[]', space=sflag, size = 0x4, offset = 0, fixed_abs, tag = 'sflag constant byte address 0x0 - dummy sync flag']
  #allocation11 [shape = 's32[]', space=sflag, size = 0x4, offset = 0, fixed_abs, tag = 'sflag constant byte address 0x0 - dummy sync flag']
  #allocation12 [shape = 's32[]', space=sflag, size = 0x4, offset = 0, fixed_abs, tag = 'sflag constant byte address 0x0 - dummy sync flag']
  #allocation13 [shape = 's32[]', space=sflag, size = 0x4, offset = 0, fixed_abs, tag = 'sflag constant byte address 0x0 - dummy sync flag']
  #allocation14 [shape = 's32[]', space=sflag, size = 0x4, offset = 0, fixed_abs, tag = 'sflag constant byte address 0x0 - dummy sync flag']
  #allocation15 [shape = 's32[]', space=sflag, size = 0x4, offset = 0, fixed_abs, tag = 'sflag constant byte address 0x0 - dummy sync flag']
  #allocation16 [shape = 's32[]', space=sflag, size = 0x4, offset = 0, fixed_abs, tag = 'sflag constant byte address 0x0 - dummy sync flag']
  #allocation17 [shape = 's32[]', space=sflag, size = 0x4, offset = 0, fixed_abs, tag = 'sflag constant byte address 0x0 - dummy sync flag']
  #allocation18 [shape = 's32[]', space=sflag, size = 0x4, offset = 0, fixed_abs, tag = 'sflag constant byte address 0x0 - dummy sync flag']
  #allocation19 [shape = 's32[]', space=sflag, size = 0x4, offset = 0, fixed_abs, tag = 'sflag constant byte address 0x0 - dummy sync flag']
  #allocation20 [shape = 's32[]', space=sflag, size = 0x4, offset = 0, fixed_abs, tag = 'sflag constant byte address 0x0 - dummy sync flag']
  #allocation21 [shape = 's32[]', space=sflag, size = 0x4, offset = 0, fixed_abs, tag = 'sflag constant byte address 0x0 - dummy sync flag']
  #allocation22 [shape = 's32[]', space=sflag, size = 0x4, offset = 0, fixed_abs, tag = 'sflag constant byte address 0x0 - dummy sync flag']
  #allocation23 [shape = 's32[]', space=sflag, size = 0x4, offset = 0, fixed_abs, tag = 'sflag constant byte address 0x0 - dummy sync flag']
  #allocation24 [shape = 's32[]', space=sflag, size = 0x4, offset = 0, fixed_abs, tag = 'sflag constant byte address 0x0 - dummy sync flag']
  #allocation25 [shape = 's32[]', space=sflag, size = 0x4, offset = 0, fixed_abs, tag = 'sflag constant byte address 0x0 - dummy sync flag']
  #allocation26 [shape = 's32[]', space=sflag, size = 0x4, offset = 0, fixed_abs, tag = 'sflag constant byte address 0x0 - dummy sync flag']
  #allocation27 [shape = 's32[]', space=sflag, size = 0x4, offset = 0, fixed_abs, tag = 'sflag constant byte address 0x0 - dummy sync flag']
  #allocation28 [shape = 's32[]', space=sflag, size = 0x4, offset = 0, fixed_abs, tag = 'sflag constant byte address 0x0 - dummy sync flag']
  #allocation29 [shape = 's32[]', space=sflag, size = 0x4, offset = 0, fixed_abs, tag = 'sflag constant byte address 0x0 - dummy sync flag']
  %s0 = inlined_call_operand.vmem [shape: f32[8,128], index: 0, kind: input, shape index: {}]
  %s1 = inlined_call_operand.vmem [shape: f32[11,1,128], index: 1, kind: input, shape index: {}]
  %s2 = inlined_call_operand.hbm [shape: bf16[11,128,128], index: 2, kind: input, shape index: {}]
  %s3 = inlined_call_operand.hbm [shape: f32[8,128], index: 3, kind: output, shape index: {}]
  %s4 = sld [smem:[#allocation0]]
  $region62: #{neural_net02_forward.1} parent=0
    _
  %s6 = ssub.s32 1, %s4
  %s7 = scalar_select 0, %s6, %s4
  $region1: #{neural_net02_forward.1} parent=0
    #allocation4 [shape = 'u8[4096]{0}', space=vmem, size = 0x1000, scoped, tag = 'output window, operand 0, single buffered']
    #allocation5 [shape = 's32[1]{0}', space=sflag, size = 0x4, scoped, tag = 'scoped memory for neural_net02_forward.1']
    %8 = vsyncpa [#allocation5], 0
    // Predicated region
    $region2: #{neural_net02_forward.1} parent=1 // pred_check
      _
    $region3: #{neural_net02_forward.1} parent=1 // pred_check_branch
      %10 = sbr.rel (0) target = $region5
    $region4: #{neural_net02_forward.1} parent=1 // pred_region
      _
    $region5: #{neural_net02_forward.1} parent=1 // pred_fallthru
      _
    // Predicated region
    $region6: #{neural_net02_forward.1} parent=1 // pred_check
      _
    $region7: #{neural_net02_forward.1} parent=1 // pred_check_branch
      %12 = sbr.rel (0) target = $region9
    $region8: #{neural_net02_forward.1} parent=1 // pred_region
      _
    $region9: #{neural_net02_forward.1} parent=1 // pred_fallthru
      _
    // Predicated region
    $region10: #{neural_net02_forward.1} parent=1 // pred_check
      _
    $region11: #{neural_net02_forward.1} parent=1 // pred_check_branch
      %15 = sbr.rel target = $region13
    $region12: #{neural_net02_forward.1} parent=1 // pred_region
      %16 = sst [smem:[#allocation8]] [#allocation7]
      %17 = sst [smem:[#allocation9]] [#allocation6]
    $region13: #{neural_net02_forward.1} parent=1 // pred_fallthru
      _
    %19 = shalt.err (0)
    %s21 = sshll.u32 [#allocation2], 4
    %s22 = int_to_ptr.vmem [resolvable:$true] %s21
    %24 = dma.hbm_to_vmem [thread:$0]  %s2, 1024, %s22, [#allocation3]
    %v25 = vld [vmem:[%s0] sm:$0xff]
    %s26 = scalar_lea.hbm %s2, 1024
    %s27 = scalar_lea.vmem [#allocation2], 64
    %s28 = scalar_lea.sflag [#allocation3], 1
    // Predicated region
    $region14: #{neural_net02_forward.1} parent=1 // pred_check
      _
    $region15: #{neural_net02_forward.1} parent=1 // pred_check_branch
      %30 = sbr.rel target = $region17
    $region16: #{neural_net02_forward.1} parent=1 // pred_region
      %31 = sst [smem:[#allocation8]] [#allocation11]
      %32 = sst [smem:[#allocation9]] [#allocation10]
    $region17: #{neural_net02_forward.1} parent=1 // pred_fallthru
      _
    %34 = shalt.err (0)
    %s36 = sshll.u32 %s27, 4
    %s37 = int_to_ptr.vmem [resolvable:$true] %s36
    %39 = dma.hbm_to_vmem [thread:$0]  %s26, 1024, %s37, %s28
    %s40 = smul.u32 4, 16
    %s41 = smul.u32 %s40, 1
    %s42 = sshll.u32 %s41, 4
    %43 = dma.done [#allocation3], %s42
    %v44 = vpack.c.bf16 %v25, %v25
    %v45 = vld [vmem:[#allocation2] sm:$0xf]
    %v46 = vld [vmem:[#allocation2 + $0x4] sm:$0xf]
    %v47 = vld [vmem:[#allocation2 + $0x8] sm:$0xf]
    %v48 = vld [vmem:[#allocation2 + $0xc] sm:$0xf]
    %v49 = vld [vmem:[#allocation2 + $0x10] sm:$0xf]
    %v50 = vld [vmem:[#allocation2 + $0x14] sm:$0xf]
    %v51 = vld [vmem:[#allocation2 + $0x18] sm:$0xf]
    %v52 = vld [vmem:[#allocation2 + $0x1c] sm:$0xf]
    %v53 = vld [vmem:[#allocation2 + $0x20] sm:$0xf]
    %v54 = vld [vmem:[#allocation2 + $0x24] sm:$0xf]
    %v55 = vld [vmem:[#allocation2 + $0x28] sm:$0xf]
    %v56 = vld [vmem:[#allocation2 + $0x2c] sm:$0xf]
    %v57 = vld [vmem:[#allocation2 + $0x30] sm:$0xf]
    %v58 = vld [vmem:[#allocation2 + $0x34] sm:$0xf]
    %v59 = vld [vmem:[#allocation2 + $0x38] sm:$0xf]
    %v60 = vld [vmem:[#allocation2 + $0x3c] sm:$0xf]
    %v61 = vld [vmem:[%s1] sm:$0x1]
    %v63 = vlaneseq
    %v64 = vshrl.u32 %v63, 7
    %v65 = vsub.s32 0, %v64
    %v66 = vrot.slane %v61, %v65
    %v84 = vunpack.c.l.b16 %v45
    %v85 = vunpack.c.l.b16 %v46
    %v86 = vunpack.c.l.b16 %v47
    %v87 = vunpack.c.l.b16 %v48
    %v88 = vunpack.c.l.b16 %v49
    %v89 = vunpack.c.l.b16 %v50
    %v90 = vunpack.c.l.b16 %v51
    %v91 = vunpack.c.l.b16 %v52
    %v92 = vunpack.c.l.b16 %v53
    %v93 = vunpack.c.l.b16 %v54
    %v94 = vunpack.c.l.b16 %v55
    %v95 = vunpack.c.l.b16 %v56
    %v96 = vunpack.c.l.b16 %v57
    %v97 = vunpack.c.l.b16 %v58
    %v98 = vunpack.c.l.b16 %v59
    %v99 = vunpack.c.l.b16 %v60
    %v100 = vpack.c.b16 %v85, %v84
    %v101 = vpack.c.b16 %v87, %v86
    %v102 = vpack.c.b16 %v89, %v88
    %v103 = vpack.c.b16 %v91, %v90
    %v104 = vpack.c.b16 %v93, %v92
    %v105 = vpack.c.b16 %v95, %v94
    %v106 = vpack.c.b16 %v97, %v96
    %v107 = vpack.c.b16 %v99, %v98
    %116 = vmatprep.subr.bf16.mxu0 0
    %117 = vmatpush1.bf16.msra.mxu0 %v107
    %118 = vmatprep.subr.bf16.mxu0 0
    %119 = vmatpush1.bf16.msra.mxu0 %v106
    %120 = vmatprep.subr.bf16.mxu0 0
    %121 = vmatpush1.bf16.msra.mxu0 %v105
    %122 = vmatprep.subr.bf16.mxu0 0
    %123 = vmatpush1.bf16.msra.mxu0 %v104
    %124 = vmatprep.subr.bf16.mxu0 0
    %125 = vmatpush1.bf16.msra.mxu0 %v103
    %126 = vmatprep.subr.bf16.mxu0 0
    %127 = vmatpush1.bf16.msra.mxu0 %v102
    %128 = vmatprep.subr.bf16.mxu0 0
    %129 = vmatpush1.bf16.msra.mxu0 %v101
    %130 = vmatprep.subr.bf16.mxu0 0
    %131 = vmatpush1.bf16.msra.mxu0 %v100
    %132 = vmatprep.subr.bf16.mxu0 0
    %133 = vmatpush2.bf16.msra.mxu0 0
    %134 = vmatprep.subr.bf16.mxu0 0
    %135 = vmatpush2.bf16.msra.mxu0 0
    %136 = vmatprep.subr.bf16.mxu0 0
    %137 = vmatpush2.bf16.msra.mxu0 0
    %138 = vmatprep.subr.bf16.mxu0 0
    %139 = vmatpush2.bf16.msra.mxu0 0
    %140 = vmatprep.subr.bf16.mxu0 0
    %141 = vmatpush2.bf16.msra.mxu0 0
    %142 = vmatprep.subr.bf16.mxu0 0
    %143 = vmatpush2.bf16.msra.mxu0 0
    %144 = vmatprep.subr.bf16.mxu0 0
    %145 = vmatpush2.bf16.msra.mxu0 0
    %146 = vmatprep.subr.bf16.mxu0 0
    %147 = vmatpush2.bf16.msra.mxu0 0
    %148 = vmatprep.mubr.bf16.mxu0 0
    %149 = vmatmul.mubr.bf16.gmra.mxu0 %v44
    %v150 = vpop.f32.mrf.mxu0
    %v151 = vadd.f32 %v66, %v150
    %v152 = vpop.f32.mrf.mxu0
    %v153 = vpop.f32.mrf.mxu0
    %v154 = vpop.f32.mrf.mxu0
    %155 = vdwg.mxu0
    %v156 = vmax.f32 %v151, 0.0
    %s157 = scalar_lea.hbm %s2, 2048
    // Predicated region
    $region18: #{neural_net02_forward.1} parent=1 // pred_check
      _
    $region19: #{neural_net02_forward.1} parent=1 // pred_check_branch
      %159 = sbr.rel target = $region21
    $region20: #{neural_net02_forward.1} parent=1 // pred_region
      %160 = sst [smem:[#allocation8]] [#allocation13]
      %161 = sst [smem:[#allocation9]] [#allocation12]
    $region21: #{neural_net02_forward.1} parent=1 // pred_fallthru
      _
    %163 = shalt.err (0)
    %s165 = sshll.u32 [#allocation2], 4
    %s166 = int_to_ptr.vmem [resolvable:$true] %s165
    %168 = dma.hbm_to_vmem [thread:$0]  %s157, 1024, %s166, [#allocation3]
    %s169 = sshll.u32 %s41, 4
    %170 = dma.done %s28, %s169
    %v171 = vpack.c.bf16 %v156, %v156
    %v172 = vld [vmem:[%s27] sm:$0xf]
    %v173 = vld [vmem:[%s27 + $0x4] sm:$0xf]
    %v174 = vld [vmem:[%s27 + $0x8] sm:$0xf]
    %v175 = vld [vmem:[%s27 + $0xc] sm:$0xf]
    %v176 = vld [vmem:[%s27 + $0x10] sm:$0xf]
    %v177 = vld [vmem:[%s27 + $0x14] sm:$0xf]
    %v178 = vld [vmem:[%s27 + $0x18] sm:$0xf]
    %v179 = vld [vmem:[%s27 + $0x1c] sm:$0xf]
    %v180 = vld [vmem:[%s27 + $0x20] sm:$0xf]
    %v181 = vld [vmem:[%s27 + $0x24] sm:$0xf]
    %v182 = vld [vmem:[%s27 + $0x28] sm:$0xf]
    %v183 = vld [vmem:[%s27 + $0x2c] sm:$0xf]
    %v184 = vld [vmem:[%s27 + $0x30] sm:$0xf]
    %v185 = vld [vmem:[%s27 + $0x34] sm:$0xf]
    %v186 = vld [vmem:[%s27 + $0x38] sm:$0xf]
    %v187 = vld [vmem:[%s27 + $0x3c] sm:$0xf]
    %s188 = scalar_lea.vmem %s1, 1
    %v189 = vld [vmem:[%s188] sm:$0x1]
    %v191 = vlaneseq
    %v192 = vshrl.u32 %v191, 7
    %v193 = vsub.s32 0, %v192
    %v194 = vrot.slane %v189, %v193
    %v212 = vunpack.c.l.b16 %v172
    %v213 = vunpack.c.l.b16 %v173
    %v214 = vunpack.c.l.b16 %v174
    %v215 = vunpack.c.l.b16 %v175
    %v216 = vunpack.c.l.b16 %v176
    %v217 = vunpack.c.l.b16 %v177
    %v218 = vunpack.c.l.b16 %v178
    %v219 = vunpack.c.l.b16 %v179
    %v220 = vunpack.c.l.b16 %v180
    %v221 = vunpack.c.l.b16 %v181
    %v222 = vunpack.c.l.b16 %v182
    %v223 = vunpack.c.l.b16 %v183
    %v224 = vunpack.c.l.b16 %v184
    %v225 = vunpack.c.l.b16 %v185
    %v226 = vunpack.c.l.b16 %v186
    %v227 = vunpack.c.l.b16 %v187
    %v228 = vpack.c.b16 %v213, %v212
    %v229 = vpack.c.b16 %v215, %v214
    %v230 = vpack.c.b16 %v217, %v216
    %v231 = vpack.c.b16 %v219, %v218
    %v232 = vpack.c.b16 %v221, %v220
    %v233 = vpack.c.b16 %v223, %v222
    %v234 = vpack.c.b16 %v225, %v224
    %v235 = vpack.c.b16 %v227, %v226
    %244 = vmatprep.subr.bf16.mxu0 0
    %245 = vmatpush1.bf16.msra.mxu0 %v235
    %246 = vmatprep.subr.bf16.mxu0 0
    %247 = vmatpush1.bf16.msra.mxu0 %v234
    %248 = vmatprep.subr.bf16.mxu0 0
    %249 = vmatpush1.bf16.msra.mxu0 %v233
    %250 = vmatprep.subr.bf16.mxu0 0
    %251 = vmatpush1.bf16.msra.mxu0 %v232
    %252 = vmatprep.subr.bf16.mxu0 0
    %253 = vmatpush1.bf16.msra.mxu0 %v231
    %254 = vmatprep.subr.bf16.mxu0 0
    %255 = vmatpush1.bf16.msra.mxu0 %v230
    %256 = vmatprep.subr.bf16.mxu0 0
    %257 = vmatpush1.bf16.msra.mxu0 %v229
    %258 = vmatprep.subr.bf16.mxu0 0
    %259 = vmatpush1.bf16.msra.mxu0 %v228
    %260 = vmatprep.subr.bf16.mxu0 0
    %261 = vmatpush2.bf16.msra.mxu0 0
    %262 = vmatprep.subr.bf16.mxu0 0
    %263 = vmatpush2.bf16.msra.mxu0 0
    %264 = vmatprep.subr.bf16.mxu0 0
    %265 = vmatpush2.bf16.msra.mxu0 0
    %266 = vmatprep.subr.bf16.mxu0 0
    %267 = vmatpush2.bf16.msra.mxu0 0
    %268 = vmatprep.subr.bf16.mxu0 0
    %269 = vmatpush2.bf16.msra.mxu0 0
    %270 = vmatprep.subr.bf16.mxu0 0
    %271 = vmatpush2.bf16.msra.mxu0 0
    %272 = vmatprep.subr.bf16.mxu0 0
    %273 = vmatpush2.bf16.msra.mxu0 0
    %274 = vmatprep.subr.bf16.mxu0 0
    %275 = vmatpush2.bf16.msra.mxu0 0
    %276 = vmatprep.mubr.bf16.mxu0 0
    %277 = vmatmul.mubr.bf16.gmra.mxu0 %v171
    %v278 = vpop.f32.mrf.mxu0
    %v279 = vadd.f32 %v194, %v278
    %v280 = vpop.f32.mrf.mxu0
    %v281 = vpop.f32.mrf.mxu0
    %v282 = vpop.f32.mrf.mxu0
    %283 = vdwg.mxu0
    %v284 = vmax.f32 %v279, 0.0
    %s285 = scalar_lea.hbm %s2, 3072
    // Predicated region
    $region22: #{neural_net02_forward.1} parent=1 // pred_check
      _
    $region23: #{neural_net02_forward.1} parent=1 // pred_check_branch
      %287 = sbr.rel target = $region25
    $region24: #{neural_net02_forward.1} parent=1 // pred_region
      %288 = sst [smem:[#allocation8]] [#allocation15]
      %289 = sst [smem:[#allocation9]] [#allocation14]
    $region25: #{neural_net02_forward.1} parent=1 // pred_fallthru
      _
    %291 = shalt.err (0)
    %s293 = sshll.u32 %s27, 4
    %s294 = int_to_ptr.vmem [resolvable:$true] %s293
    %296 = dma.hbm_to_vmem [thread:$0]  %s285, 1024, %s294, %s28
    %s297 = sshll.u32 %s41, 4
    %298 = dma.done [#allocation3], %s297
    %v299 = vpack.c.bf16 %v284, %v284
    %v300 = vld [vmem:[#allocation2] sm:$0xf]
    %v301 = vld [vmem:[#allocation2 + $0x4] sm:$0xf]
    %v302 = vld [vmem:[#allocation2 + $0x8] sm:$0xf]
    %v303 = vld [vmem:[#allocation2 + $0xc] sm:$0xf]
    %v304 = vld [vmem:[#allocation2 + $0x10] sm:$0xf]
    %v305 = vld [vmem:[#allocation2 + $0x14] sm:$0xf]
    %v306 = vld [vmem:[#allocation2 + $0x18] sm:$0xf]
    %v307 = vld [vmem:[#allocation2 + $0x1c] sm:$0xf]
    %v308 = vld [vmem:[#allocation2 + $0x20] sm:$0xf]
    %v309 = vld [vmem:[#allocation2 + $0x24] sm:$0xf]
    %v310 = vld [vmem:[#allocation2 + $0x28] sm:$0xf]
    %v311 = vld [vmem:[#allocation2 + $0x2c] sm:$0xf]
    %v312 = vld [vmem:[#allocation2 + $0x30] sm:$0xf]
    %v313 = vld [vmem:[#allocation2 + $0x34] sm:$0xf]
    %v314 = vld [vmem:[#allocation2 + $0x38] sm:$0xf]
    %v315 = vld [vmem:[#allocation2 + $0x3c] sm:$0xf]
    %s316 = scalar_lea.vmem %s1, 2
    %v317 = vld [vmem:[%s316] sm:$0x1]
    %v319 = vlaneseq
    %v320 = vshrl.u32 %v319, 7
    %v321 = vsub.s32 0, %v320
    %v322 = vrot.slane %v317, %v321
    %v340 = vunpack.c.l.b16 %v300
    %v341 = vunpack.c.l.b16 %v301
    %v342 = vunpack.c.l.b16 %v302
    %v343 = vunpack.c.l.b16 %v303
    %v344 = vunpack.c.l.b16 %v304
    %v345 = vunpack.c.l.b16 %v305
    %v346 = vunpack.c.l.b16 %v306
    %v347 = vunpack.c.l.b16 %v307
    %v348 = vunpack.c.l.b16 %v308
    %v349 = vunpack.c.l.b16 %v309
    %v350 = vunpack.c.l.b16 %v310
    %v351 = vunpack.c.l.b16 %v311
    %v352 = vunpack.c.l.b16 %v312
    %v353 = vunpack.c.l.b16 %v313
    %v354 = vunpack.c.l.b16 %v314
    %v355 = vunpack.c.l.b16 %v315
    %v356 = vpack.c.b16 %v341, %v340
    %v357 = vpack.c.b16 %v343, %v342
    %v358 = vpack.c.b16 %v345, %v344
    %v359 = vpack.c.b16 %v347, %v346
    %v360 = vpack.c.b16 %v349, %v348
    %v361 = vpack.c.b16 %v351, %v350
    %v362 = vpack.c.b16 %v353, %v352
    %v363 = vpack.c.b16 %v355, %v354
    %372 = vmatprep.subr.bf16.mxu0 0
    %373 = vmatpush1.bf16.msra.mxu0 %v363
    %374 = vmatprep.subr.bf16.mxu0 0
    %375 = vmatpush1.bf16.msra.mxu0 %v362
    %376 = vmatprep.subr.bf16.mxu0 0
    %377 = vmatpush1.bf16.msra.mxu0 %v361
    %378 = vmatprep.subr.bf16.mxu0 0
    %379 = vmatpush1.bf16.msra.mxu0 %v360
    %380 = vmatprep.subr.bf16.mxu0 0
    %381 = vmatpush1.bf16.msra.mxu0 %v359
    %382 = vmatprep.subr.bf16.mxu0 0
    %383 = vmatpush1.bf16.msra.mxu0 %v358
    %384 = vmatprep.subr.bf16.mxu0 0
    %385 = vmatpush1.bf16.msra.mxu0 %v357
    %386 = vmatprep.subr.bf16.mxu0 0
    %387 = vmatpush1.bf16.msra.mxu0 %v356
    %388 = vmatprep.subr.bf16.mxu0 0
    %389 = vmatpush2.bf16.msra.mxu0 0
    %390 = vmatprep.subr.bf16.mxu0 0
    %391 = vmatpush2.bf16.msra.mxu0 0
    %392 = vmatprep.subr.bf16.mxu0 0
    %393 = vmatpush2.bf16.msra.mxu0 0
    %394 = vmatprep.subr.bf16.mxu0 0
    %395 = vmatpush2.bf16.msra.mxu0 0
    %396 = vmatprep.subr.bf16.mxu0 0
    %397 = vmatpush2.bf16.msra.mxu0 0
    %398 = vmatprep.subr.bf16.mxu0 0
    %399 = vmatpush2.bf16.msra.mxu0 0
    %400 = vmatprep.subr.bf16.mxu0 0
    %401 = vmatpush2.bf16.msra.mxu0 0
    %402 = vmatprep.subr.bf16.mxu0 0
    %403 = vmatpush2.bf16.msra.mxu0 0
    %404 = vmatprep.mubr.bf16.mxu0 0
    %405 = vmatmul.mubr.bf16.gmra.mxu0 %v299
    %v406 = vpop.f32.mrf.mxu0
    %v407 = vadd.f32 %v322, %v406
    %v408 = vpop.f32.mrf.mxu0
    %v409 = vpop.f32.mrf.mxu0
    %v410 = vpop.f32.mrf.mxu0
    %411 = vdwg.mxu0
    %v412 = vmax.f32 %v407, 0.0
    %s413 = scalar_lea.hbm %s2, 4096
    // Predicated region
    $region26: #{neural_net02_forward.1} parent=1 // pred_check
      _
    $region27: #{neural_net02_forward.1} parent=1 // pred_check_branch
      %415 = sbr.rel target = $region29
    $region28: #{neural_net02_forward.1} parent=1 // pred_region
      %416 = sst [smem:[#allocation8]] [#allocation17]
      %417 = sst [smem:[#allocation9]] [#allocation16]
    $region29: #{neural_net02_forward.1} parent=1 // pred_fallthru
      _
    %419 = shalt.err (0)
    %s421 = sshll.u32 [#allocation2], 4
    %s422 = int_to_ptr.vmem [resolvable:$true] %s421
    %424 = dma.hbm_to_vmem [thread:$0]  %s413, 1024, %s422, [#allocation3]
    %s425 = sshll.u32 %s41, 4
    %426 = dma.done %s28, %s425
    %v427 = vpack.c.bf16 %v412, %v412
    %v428 = vld [vmem:[%s27] sm:$0xf]
    %v429 = vld [vmem:[%s27 + $0x4] sm:$0xf]
    %v430 = vld [vmem:[%s27 + $0x8] sm:$0xf]
    %v431 = vld [vmem:[%s27 + $0xc] sm:$0xf]
    %v432 = vld [vmem:[%s27 + $0x10] sm:$0xf]
    %v433 = vld [vmem:[%s27 + $0x14] sm:$0xf]
    %v434 = vld [vmem:[%s27 + $0x18] sm:$0xf]
    %v435 = vld [vmem:[%s27 + $0x1c] sm:$0xf]
    %v436 = vld [vmem:[%s27 + $0x20] sm:$0xf]
    %v437 = vld [vmem:[%s27 + $0x24] sm:$0xf]
    %v438 = vld [vmem:[%s27 + $0x28] sm:$0xf]
    %v439 = vld [vmem:[%s27 + $0x2c] sm:$0xf]
    %v440 = vld [vmem:[%s27 + $0x30] sm:$0xf]
    %v441 = vld [vmem:[%s27 + $0x34] sm:$0xf]
    %v442 = vld [vmem:[%s27 + $0x38] sm:$0xf]
    %v443 = vld [vmem:[%s27 + $0x3c] sm:$0xf]
    %s444 = scalar_lea.vmem %s1, 3
    %v445 = vld [vmem:[%s444] sm:$0x1]
    %v447 = vlaneseq
    %v448 = vshrl.u32 %v447, 7
    %v449 = vsub.s32 0, %v448
    %v450 = vrot.slane %v445, %v449
    %v468 = vunpack.c.l.b16 %v428
    %v469 = vunpack.c.l.b16 %v429
    %v470 = vunpack.c.l.b16 %v430
    %v471 = vunpack.c.l.b16 %v431
    %v472 = vunpack.c.l.b16 %v432
    %v473 = vunpack.c.l.b16 %v433
    %v474 = vunpack.c.l.b16 %v434
    %v475 = vunpack.c.l.b16 %v435
    %v476 = vunpack.c.l.b16 %v436
    %v477 = vunpack.c.l.b16 %v437
    %v478 = vunpack.c.l.b16 %v438
    %v479 = vunpack.c.l.b16 %v439
    %v480 = vunpack.c.l.b16 %v440
    %v481 = vunpack.c.l.b16 %v441
    %v482 = vunpack.c.l.b16 %v442
    %v483 = vunpack.c.l.b16 %v443
    %v484 = vpack.c.b16 %v469, %v468
    %v485 = vpack.c.b16 %v471, %v470
    %v486 = vpack.c.b16 %v473, %v472
    %v487 = vpack.c.b16 %v475, %v474
    %v488 = vpack.c.b16 %v477, %v476
    %v489 = vpack.c.b16 %v479, %v478
    %v490 = vpack.c.b16 %v481, %v480
    %v491 = vpack.c.b16 %v483, %v482
    %500 = vmatprep.subr.bf16.mxu0 0
    %501 = vmatpush1.bf16.msra.mxu0 %v491
    %502 = vmatprep.subr.bf16.mxu0 0
    %503 = vmatpush1.bf16.msra.mxu0 %v490
    %504 = vmatprep.subr.bf16.mxu0 0
    %505 = vmatpush1.bf16.msra.mxu0 %v489
    %506 = vmatprep.subr.bf16.mxu0 0
    %507 = vmatpush1.bf16.msra.mxu0 %v488
    %508 = vmatprep.subr.bf16.mxu0 0
    %509 = vmatpush1.bf16.msra.mxu0 %v487
    %510 = vmatprep.subr.bf16.mxu0 0
    %511 = vmatpush1.bf16.msra.mxu0 %v486
    %512 = vmatprep.subr.bf16.mxu0 0
    %513 = vmatpush1.bf16.msra.mxu0 %v485
    %514 = vmatprep.subr.bf16.mxu0 0
    %515 = vmatpush1.bf16.msra.mxu0 %v484
    %516 = vmatprep.subr.bf16.mxu0 0
    %517 = vmatpush2.bf16.msra.mxu0 0
    %518 = vmatprep.subr.bf16.mxu0 0
    %519 = vmatpush2.bf16.msra.mxu0 0
    %520 = vmatprep.subr.bf16.mxu0 0
    %521 = vmatpush2.bf16.msra.mxu0 0
    %522 = vmatprep.subr.bf16.mxu0 0
    %523 = vmatpush2.bf16.msra.mxu0 0
    %524 = vmatprep.subr.bf16.mxu0 0
    %525 = vmatpush2.bf16.msra.mxu0 0
    %526 = vmatprep.subr.bf16.mxu0 0
    %527 = vmatpush2.bf16.msra.mxu0 0
    %528 = vmatprep.subr.bf16.mxu0 0
    %529 = vmatpush2.bf16.msra.mxu0 0
    %530 = vmatprep.subr.bf16.mxu0 0
    %531 = vmatpush2.bf16.msra.mxu0 0
    %532 = vmatprep.mubr.bf16.mxu0 0
    %533 = vmatmul.mubr.bf16.gmra.mxu0 %v427
    %v534 = vpop.f32.mrf.mxu0
    %v535 = vadd.f32 %v450, %v534
    %v536 = vpop.f32.mrf.mxu0
    %v537 = vpop.f32.mrf.mxu0
    %v538 = vpop.f32.mrf.mxu0
    %539 = vdwg.mxu0
    %v540 = vmax.f32 %v535, 0.0
    %s541 = scalar_lea.hbm %s2, 5120
    // Predicated region
    $region30: #{neural_net02_forward.1} parent=1 // pred_check
      _
    $region31: #{neural_net02_forward.1} parent=1 // pred_check_branch
      %543 = sbr.rel target = $region33
    $region32: #{neural_net02_forward.1} parent=1 // pred_region
      %544 = sst [smem:[#allocation8]] [#allocation19]
      %545 = sst [smem:[#allocation9]] [#allocation18]
    $region33: #{neural_net02_forward.1} parent=1 // pred_fallthru
      _
    %547 = shalt.err (0)
    %s549 = sshll.u32 %s27, 4
    %s550 = int_to_ptr.vmem [resolvable:$true] %s549
    %552 = dma.hbm_to_vmem [thread:$0]  %s541, 1024, %s550, %s28
    %s553 = sshll.u32 %s41, 4
    %554 = dma.done [#allocation3], %s553
    %v555 = vpack.c.bf16 %v540, %v540
    %v556 = vld [vmem:[#allocation2] sm:$0xf]
    %v557 = vld [vmem:[#allocation2 + $0x4] sm:$0xf]
    %v558 = vld [vmem:[#allocation2 + $0x8] sm:$0xf]
    %v559 = vld [vmem:[#allocation2 + $0xc] sm:$0xf]
    %v560 = vld [vmem:[#allocation2 + $0x10] sm:$0xf]
    %v561 = vld [vmem:[#allocation2 + $0x14] sm:$0xf]
    %v562 = vld [vmem:[#allocation2 + $0x18] sm:$0xf]
    %v563 = vld [vmem:[#allocation2 + $0x1c] sm:$0xf]
    %v564 = vld [vmem:[#allocation2 + $0x20] sm:$0xf]
    %v565 = vld [vmem:[#allocation2 + $0x24] sm:$0xf]
    %v566 = vld [vmem:[#allocation2 + $0x28] sm:$0xf]
    %v567 = vld [vmem:[#allocation2 + $0x2c] sm:$0xf]
    %v568 = vld [vmem:[#allocation2 + $0x30] sm:$0xf]
    %v569 = vld [vmem:[#allocation2 + $0x34] sm:$0xf]
    %v570 = vld [vmem:[#allocation2 + $0x38] sm:$0xf]
    %v571 = vld [vmem:[#allocation2 + $0x3c] sm:$0xf]
    %s572 = scalar_lea.vmem %s1, 4
    %v573 = vld [vmem:[%s572] sm:$0x1]
    %v575 = vlaneseq
    %v576 = vshrl.u32 %v575, 7
    %v577 = vsub.s32 0, %v576
    %v578 = vrot.slane %v573, %v577
    %v596 = vunpack.c.l.b16 %v556
    %v597 = vunpack.c.l.b16 %v557
    %v598 = vunpack.c.l.b16 %v558
    %v599 = vunpack.c.l.b16 %v559
    %v600 = vunpack.c.l.b16 %v560
    %v601 = vunpack.c.l.b16 %v561
    %v602 = vunpack.c.l.b16 %v562
    %v603 = vunpack.c.l.b16 %v563
    %v604 = vunpack.c.l.b16 %v564
    %v605 = vunpack.c.l.b16 %v565
    %v606 = vunpack.c.l.b16 %v566
    %v607 = vunpack.c.l.b16 %v567
    %v608 = vunpack.c.l.b16 %v568
    %v609 = vunpack.c.l.b16 %v569
    %v610 = vunpack.c.l.b16 %v570
    %v611 = vunpack.c.l.b16 %v571
    %v612 = vpack.c.b16 %v597, %v596
    %v613 = vpack.c.b16 %v599, %v598
    %v614 = vpack.c.b16 %v601, %v600
    %v615 = vpack.c.b16 %v603, %v602
    %v616 = vpack.c.b16 %v605, %v604
    %v617 = vpack.c.b16 %v607, %v606
    %v618 = vpack.c.b16 %v609, %v608
    %v619 = vpack.c.b16 %v611, %v610
    %628 = vmatprep.subr.bf16.mxu0 0
    %629 = vmatpush1.bf16.msra.mxu0 %v619
    %630 = vmatprep.subr.bf16.mxu0 0
    %631 = vmatpush1.bf16.msra.mxu0 %v618
    %632 = vmatprep.subr.bf16.mxu0 0
    %633 = vmatpush1.bf16.msra.mxu0 %v617
    %634 = vmatprep.subr.bf16.mxu0 0
    %635 = vmatpush1.bf16.msra.mxu0 %v616
    %636 = vmatprep.subr.bf16.mxu0 0
    %637 = vmatpush1.bf16.msra.mxu0 %v615
    %638 = vmatprep.subr.bf16.mxu0 0
    %639 = vmatpush1.bf16.msra.mxu0 %v614
    %640 = vmatprep.subr.bf16.mxu0 0
    %641 = vmatpush1.bf16.msra.mxu0 %v613
    %642 = vmatprep.subr.bf16.mxu0 0
    %643 = vmatpush1.bf16.msra.mxu0 %v612
    %644 = vmatprep.subr.bf16.mxu0 0
    %645 = vmatpush2.bf16.msra.mxu0 0
    %646 = vmatprep.subr.bf16.mxu0 0
    %647 = vmatpush2.bf16.msra.mxu0 0
    %648 = vmatprep.subr.bf16.mxu0 0
    %649 = vmatpush2.bf16.msra.mxu0 0
    %650 = vmatprep.subr.bf16.mxu0 0
    %651 = vmatpush2.bf16.msra.mxu0 0
    %652 = vmatprep.subr.bf16.mxu0 0
    %653 = vmatpush2.bf16.msra.mxu0 0
    %654 = vmatprep.subr.bf16.mxu0 0
    %655 = vmatpush2.bf16.msra.mxu0 0
    %656 = vmatprep.subr.bf16.mxu0 0
    %657 = vmatpush2.bf16.msra.mxu0 0
    %658 = vmatprep.subr.bf16.mxu0 0
    %659 = vmatpush2.bf16.msra.mxu0 0
    %660 = vmatprep.mubr.bf16.mxu0 0
    %661 = vmatmul.mubr.bf16.gmra.mxu0 %v555
    %v662 = vpop.f32.mrf.mxu0
    %v663 = vadd.f32 %v578, %v662
    %v664 = vpop.f32.mrf.mxu0
    %v665 = vpop.f32.mrf.mxu0
    %v666 = vpop.f32.mrf.mxu0
    %667 = vdwg.mxu0
    %v668 = vmax.f32 %v663, 0.0
    %s669 = scalar_lea.hbm %s2, 6144
    // Predicated region
    $region34: #{neural_net02_forward.1} parent=1 // pred_check
      _
    $region35: #{neural_net02_forward.1} parent=1 // pred_check_branch
      %671 = sbr.rel target = $region37
    $region36: #{neural_net02_forward.1} parent=1 // pred_region
      %672 = sst [smem:[#allocation8]] [#allocation21]
      %673 = sst [smem:[#allocation9]] [#allocation20]
    $region37: #{neural_net02_forward.1} parent=1 // pred_fallthru
      _
    %675 = shalt.err (0)
    %s677 = sshll.u32 [#allocation2], 4
    %s678 = int_to_ptr.vmem [resolvable:$true] %s677
    %680 = dma.hbm_to_vmem [thread:$0]  %s669, 1024, %s678, [#allocation3]
    %s681 = sshll.u32 %s41, 4
    %682 = dma.done %s28, %s681
    %v683 = vpack.c.bf16 %v668, %v668
    %v684 = vld [vmem:[%s27] sm:$0xf]
    %v685 = vld [vmem:[%s27 + $0x4] sm:$0xf]
    %v686 = vld [vmem:[%s27 + $0x8] sm:$0xf]
    %v687 = vld [vmem:[%s27 + $0xc] sm:$0xf]
    %v688 = vld [vmem:[%s27 + $0x10] sm:$0xf]
    %v689 = vld [vmem:[%s27 + $0x14] sm:$0xf]
    %v690 = vld [vmem:[%s27 + $0x18] sm:$0xf]
    %v691 = vld [vmem:[%s27 + $0x1c] sm:$0xf]
    %v692 = vld [vmem:[%s27 + $0x20] sm:$0xf]
    %v693 = vld [vmem:[%s27 + $0x24] sm:$0xf]
    %v694 = vld [vmem:[%s27 + $0x28] sm:$0xf]
    %v695 = vld [vmem:[%s27 + $0x2c] sm:$0xf]
    %v696 = vld [vmem:[%s27 + $0x30] sm:$0xf]
    %v697 = vld [vmem:[%s27 + $0x34] sm:$0xf]
    %v698 = vld [vmem:[%s27 + $0x38] sm:$0xf]
    %v699 = vld [vmem:[%s27 + $0x3c] sm:$0xf]
    %s700 = scalar_lea.vmem %s1, 5
    %v701 = vld [vmem:[%s700] sm:$0x1]
    %v703 = vlaneseq
    %v704 = vshrl.u32 %v703, 7
    %v705 = vsub.s32 0, %v704
    %v706 = vrot.slane %v701, %v705
    %v724 = vunpack.c.l.b16 %v684
    %v725 = vunpack.c.l.b16 %v685
    %v726 = vunpack.c.l.b16 %v686
    %v727 = vunpack.c.l.b16 %v687
    %v728 = vunpack.c.l.b16 %v688
    %v729 = vunpack.c.l.b16 %v689
    %v730 = vunpack.c.l.b16 %v690
    %v731 = vunpack.c.l.b16 %v691
    %v732 = vunpack.c.l.b16 %v692
    %v733 = vunpack.c.l.b16 %v693
    %v734 = vunpack.c.l.b16 %v694
    %v735 = vunpack.c.l.b16 %v695
    %v736 = vunpack.c.l.b16 %v696
    %v737 = vunpack.c.l.b16 %v697
    %v738 = vunpack.c.l.b16 %v698
    %v739 = vunpack.c.l.b16 %v699
    %v740 = vpack.c.b16 %v725, %v724
    %v741 = vpack.c.b16 %v727, %v726
    %v742 = vpack.c.b16 %v729, %v728
    %v743 = vpack.c.b16 %v731, %v730
    %v744 = vpack.c.b16 %v733, %v732
    %v745 = vpack.c.b16 %v735, %v734
    %v746 = vpack.c.b16 %v737, %v736
    %v747 = vpack.c.b16 %v739, %v738
    %756 = vmatprep.subr.bf16.mxu0 0
    %757 = vmatpush1.bf16.msra.mxu0 %v747
    %758 = vmatprep.subr.bf16.mxu0 0
    %759 = vmatpush1.bf16.msra.mxu0 %v746
    %760 = vmatprep.subr.bf16.mxu0 0
    %761 = vmatpush1.bf16.msra.mxu0 %v745
    %762 = vmatprep.subr.bf16.mxu0 0
    %763 = vmatpush1.bf16.msra.mxu0 %v744
    %764 = vmatprep.subr.bf16.mxu0 0
    %765 = vmatpush1.bf16.msra.mxu0 %v743
    %766 = vmatprep.subr.bf16.mxu0 0
    %767 = vmatpush1.bf16.msra.mxu0 %v742
    %768 = vmatprep.subr.bf16.mxu0 0
    %769 = vmatpush1.bf16.msra.mxu0 %v741
    %770 = vmatprep.subr.bf16.mxu0 0
    %771 = vmatpush1.bf16.msra.mxu0 %v740
    %772 = vmatprep.subr.bf16.mxu0 0
    %773 = vmatpush2.bf16.msra.mxu0 0
    %774 = vmatprep.subr.bf16.mxu0 0
    %775 = vmatpush2.bf16.msra.mxu0 0
    %776 = vmatprep.subr.bf16.mxu0 0
    %777 = vmatpush2.bf16.msra.mxu0 0
    %778 = vmatprep.subr.bf16.mxu0 0
    %779 = vmatpush2.bf16.msra.mxu0 0
    %780 = vmatprep.subr.bf16.mxu0 0
    %781 = vmatpush2.bf16.msra.mxu0 0
    %782 = vmatprep.subr.bf16.mxu0 0
    %783 = vmatpush2.bf16.msra.mxu0 0
    %784 = vmatprep.subr.bf16.mxu0 0
    %785 = vmatpush2.bf16.msra.mxu0 0
    %786 = vmatprep.subr.bf16.mxu0 0
    %787 = vmatpush2.bf16.msra.mxu0 0
    %788 = vmatprep.mubr.bf16.mxu0 0
    %789 = vmatmul.mubr.bf16.gmra.mxu0 %v683
    %v790 = vpop.f32.mrf.mxu0
    %v791 = vadd.f32 %v706, %v790
    %v792 = vpop.f32.mrf.mxu0
    %v793 = vpop.f32.mrf.mxu0
    %v794 = vpop.f32.mrf.mxu0
    %795 = vdwg.mxu0
    %v796 = vmax.f32 %v791, 0.0
    %s797 = scalar_lea.hbm %s2, 7168
    // Predicated region
    $region38: #{neural_net02_forward.1} parent=1 // pred_check
      _
    $region39: #{neural_net02_forward.1} parent=1 // pred_check_branch
      %799 = sbr.rel target = $region41
    $region40: #{neural_net02_forward.1} parent=1 // pred_region
      %800 = sst [smem:[#allocation8]] [#allocation23]
      %801 = sst [smem:[#allocation9]] [#allocation22]
    $region41: #{neural_net02_forward.1} parent=1 // pred_fallthru
      _
    %803 = shalt.err (0)
    %s805 = sshll.u32 %s27, 4
    %s806 = int_to_ptr.vmem [resolvable:$true] %s805
    %808 = dma.hbm_to_vmem [thread:$0]  %s797, 1024, %s806, %s28
    %s809 = sshll.u32 %s41, 4
    %810 = dma.done [#allocation3], %s809
    %v811 = vpack.c.bf16 %v796, %v796
    %v812 = vld [vmem:[#allocation2] sm:$0xf]
    %v813 = vld [vmem:[#allocation2 + $0x4] sm:$0xf]
    %v814 = vld [vmem:[#allocation2 + $0x8] sm:$0xf]
    %v815 = vld [vmem:[#allocation2 + $0xc] sm:$0xf]
    %v816 = vld [vmem:[#allocation2 + $0x10] sm:$0xf]
    %v817 = vld [vmem:[#allocation2 + $0x14] sm:$0xf]
    %v818 = vld [vmem:[#allocation2 + $0x18] sm:$0xf]
    %v819 = vld [vmem:[#allocation2 + $0x1c] sm:$0xf]
    %v820 = vld [vmem:[#allocation2 + $0x20] sm:$0xf]
    %v821 = vld [vmem:[#allocation2 + $0x24] sm:$0xf]
    %v822 = vld [vmem:[#allocation2 + $0x28] sm:$0xf]
    %v823 = vld [vmem:[#allocation2 + $0x2c] sm:$0xf]
    %v824 = vld [vmem:[#allocation2 + $0x30] sm:$0xf]
    %v825 = vld [vmem:[#allocation2 + $0x34] sm:$0xf]
    %v826 = vld [vmem:[#allocation2 + $0x38] sm:$0xf]
    %v827 = vld [vmem:[#allocation2 + $0x3c] sm:$0xf]
    %s828 = scalar_lea.vmem %s1, 6
    %v829 = vld [vmem:[%s828] sm:$0x1]
    %v831 = vlaneseq
    %v832 = vshrl.u32 %v831, 7
    %v833 = vsub.s32 0, %v832
    %v834 = vrot.slane %v829, %v833
    %v852 = vunpack.c.l.b16 %v812
    %v853 = vunpack.c.l.b16 %v813
    %v854 = vunpack.c.l.b16 %v814
    %v855 = vunpack.c.l.b16 %v815
    %v856 = vunpack.c.l.b16 %v816
    %v857 = vunpack.c.l.b16 %v817
    %v858 = vunpack.c.l.b16 %v818
    %v859 = vunpack.c.l.b16 %v819
    %v860 = vunpack.c.l.b16 %v820
    %v861 = vunpack.c.l.b16 %v821
    %v862 = vunpack.c.l.b16 %v822
    %v863 = vunpack.c.l.b16 %v823
    %v864 = vunpack.c.l.b16 %v824
    %v865 = vunpack.c.l.b16 %v825
    %v866 = vunpack.c.l.b16 %v826
    %v867 = vunpack.c.l.b16 %v827
    %v868 = vpack.c.b16 %v853, %v852
    %v869 = vpack.c.b16 %v855, %v854
    %v870 = vpack.c.b16 %v857, %v856
    %v871 = vpack.c.b16 %v859, %v858
    %v872 = vpack.c.b16 %v861, %v860
    %v873 = vpack.c.b16 %v863, %v862
    %v874 = vpack.c.b16 %v865, %v864
    %v875 = vpack.c.b16 %v867, %v866
    %884 = vmatprep.subr.bf16.mxu0 0
    %885 = vmatpush1.bf16.msra.mxu0 %v875
    %886 = vmatprep.subr.bf16.mxu0 0
    %887 = vmatpush1.bf16.msra.mxu0 %v874
    %888 = vmatprep.subr.bf16.mxu0 0
    %889 = vmatpush1.bf16.msra.mxu0 %v873
    %890 = vmatprep.subr.bf16.mxu0 0
    %891 = vmatpush1.bf16.msra.mxu0 %v872
    %892 = vmatprep.subr.bf16.mxu0 0
    %893 = vmatpush1.bf16.msra.mxu0 %v871
    %894 = vmatprep.subr.bf16.mxu0 0
    %895 = vmatpush1.bf16.msra.mxu0 %v870
    %896 = vmatprep.subr.bf16.mxu0 0
    %897 = vmatpush1.bf16.msra.mxu0 %v869
    %898 = vmatprep.subr.bf16.mxu0 0
    %899 = vmatpush1.bf16.msra.mxu0 %v868
    %900 = vmatprep.subr.bf16.mxu0 0
    %901 = vmatpush2.bf16.msra.mxu0 0
    %902 = vmatprep.subr.bf16.mxu0 0
    %903 = vmatpush2.bf16.msra.mxu0 0
    %904 = vmatprep.subr.bf16.mxu0 0
    %905 = vmatpush2.bf16.msra.mxu0 0
    %906 = vmatprep.subr.bf16.mxu0 0
    %907 = vmatpush2.bf16.msra.mxu0 0
    %908 = vmatprep.subr.bf16.mxu0 0
    %909 = vmatpush2.bf16.msra.mxu0 0
    %910 = vmatprep.subr.bf16.mxu0 0
    %911 = vmatpush2.bf16.msra.mxu0 0
    %912 = vmatprep.subr.bf16.mxu0 0
    %913 = vmatpush2.bf16.msra.mxu0 0
    %914 = vmatprep.subr.bf16.mxu0 0
    %915 = vmatpush2.bf16.msra.mxu0 0
    %916 = vmatprep.mubr.bf16.mxu0 0
    %917 = vmatmul.mubr.bf16.gmra.mxu0 %v811
    %v918 = vpop.f32.mrf.mxu0
    %v919 = vadd.f32 %v834, %v918
    %v920 = vpop.f32.mrf.mxu0
    %v921 = vpop.f32.mrf.mxu0
    %v922 = vpop.f32.mrf.mxu0
    %923 = vdwg.mxu0
    %v924 = vmax.f32 %v919, 0.0
    %s925 = scalar_lea.hbm %s2, 8192
    // Predicated region
    $region42: #{neural_net02_forward.1} parent=1 // pred_check
      _
    $region43: #{neural_net02_forward.1} parent=1 // pred_check_branch
      %927 = sbr.rel target = $region45
    $region44: #{neural_net02_forward.1} parent=1 // pred_region
      %928 = sst [smem:[#allocation8]] [#allocation25]
      %929 = sst [smem:[#allocation9]] [#allocation24]
    $region45: #{neural_net02_forward.1} parent=1 // pred_fallthru
      _
    %931 = shalt.err (0)
    %s933 = sshll.u32 [#allocation2], 4
    %s934 = int_to_ptr.vmem [resolvable:$true] %s933
    %936 = dma.hbm_to_vmem [thread:$0]  %s925, 1024, %s934, [#allocation3]
    %s937 = sshll.u32 %s41, 4
    %938 = dma.done %s28, %s937
    %v939 = vpack.c.bf16 %v924, %v924
    %v940 = vld [vmem:[%s27] sm:$0xf]
    %v941 = vld [vmem:[%s27 + $0x4] sm:$0xf]
    %v942 = vld [vmem:[%s27 + $0x8] sm:$0xf]
    %v943 = vld [vmem:[%s27 + $0xc] sm:$0xf]
    %v944 = vld [vmem:[%s27 + $0x10] sm:$0xf]
    %v945 = vld [vmem:[%s27 + $0x14] sm:$0xf]
    %v946 = vld [vmem:[%s27 + $0x18] sm:$0xf]
    %v947 = vld [vmem:[%s27 + $0x1c] sm:$0xf]
    %v948 = vld [vmem:[%s27 + $0x20] sm:$0xf]
    %v949 = vld [vmem:[%s27 + $0x24] sm:$0xf]
    %v950 = vld [vmem:[%s27 + $0x28] sm:$0xf]
    %v951 = vld [vmem:[%s27 + $0x2c] sm:$0xf]
    %v952 = vld [vmem:[%s27 + $0x30] sm:$0xf]
    %v953 = vld [vmem:[%s27 + $0x34] sm:$0xf]
    %v954 = vld [vmem:[%s27 + $0x38] sm:$0xf]
    %v955 = vld [vmem:[%s27 + $0x3c] sm:$0xf]
    %s956 = scalar_lea.vmem %s1, 7
    %v957 = vld [vmem:[%s956] sm:$0x1]
    %v959 = vlaneseq
    %v960 = vshrl.u32 %v959, 7
    %v961 = vsub.s32 0, %v960
    %v962 = vrot.slane %v957, %v961
    %v980 = vunpack.c.l.b16 %v940
    %v981 = vunpack.c.l.b16 %v941
    %v982 = vunpack.c.l.b16 %v942
    %v983 = vunpack.c.l.b16 %v943
    %v984 = vunpack.c.l.b16 %v944
    %v985 = vunpack.c.l.b16 %v945
    %v986 = vunpack.c.l.b16 %v946
    %v987 = vunpack.c.l.b16 %v947
    %v988 = vunpack.c.l.b16 %v948
    %v989 = vunpack.c.l.b16 %v949
    %v990 = vunpack.c.l.b16 %v950
    %v991 = vunpack.c.l.b16 %v951
    %v992 = vunpack.c.l.b16 %v952
    %v993 = vunpack.c.l.b16 %v953
    %v994 = vunpack.c.l.b16 %v954
    %v995 = vunpack.c.l.b16 %v955
    %v996 = vpack.c.b16 %v981, %v980
    %v997 = vpack.c.b16 %v983, %v982
    %v998 = vpack.c.b16 %v985, %v984
    %v999 = vpack.c.b16 %v987, %v986
    %v1000 = vpack.c.b16 %v989, %v988
    %v1001 = vpack.c.b16 %v991, %v990
    %v1002 = vpack.c.b16 %v993, %v992
    %v1003 = vpack.c.b16 %v995, %v994
    %1012 = vmatprep.subr.bf16.mxu0 0
    %1013 = vmatpush1.bf16.msra.mxu0 %v1003
    %1014 = vmatprep.subr.bf16.mxu0 0
    %1015 = vmatpush1.bf16.msra.mxu0 %v1002
    %1016 = vmatprep.subr.bf16.mxu0 0
    %1017 = vmatpush1.bf16.msra.mxu0 %v1001
    %1018 = vmatprep.subr.bf16.mxu0 0
    %1019 = vmatpush1.bf16.msra.mxu0 %v1000
    %1020 = vmatprep.subr.bf16.mxu0 0
    %1021 = vmatpush1.bf16.msra.mxu0 %v999
    %1022 = vmatprep.subr.bf16.mxu0 0
    %1023 = vmatpush1.bf16.msra.mxu0 %v998
    %1024 = vmatprep.subr.bf16.mxu0 0
    %1025 = vmatpush1.bf16.msra.mxu0 %v997
    %1026 = vmatprep.subr.bf16.mxu0 0
    %1027 = vmatpush1.bf16.msra.mxu0 %v996
    %1028 = vmatprep.subr.bf16.mxu0 0
    %1029 = vmatpush2.bf16.msra.mxu0 0
    %1030 = vmatprep.subr.bf16.mxu0 0
    %1031 = vmatpush2.bf16.msra.mxu0 0
    %1032 = vmatprep.subr.bf16.mxu0 0
    %1033 = vmatpush2.bf16.msra.mxu0 0
    %1034 = vmatprep.subr.bf16.mxu0 0
    %1035 = vmatpush2.bf16.msra.mxu0 0
    %1036 = vmatprep.subr.bf16.mxu0 0
    %1037 = vmatpush2.bf16.msra.mxu0 0
    %1038 = vmatprep.subr.bf16.mxu0 0
    %1039 = vmatpush2.bf16.msra.mxu0 0
    %1040 = vmatprep.subr.bf16.mxu0 0
    %1041 = vmatpush2.bf16.msra.mxu0 0
    %1042 = vmatprep.subr.bf16.mxu0 0
    %1043 = vmatpush2.bf16.msra.mxu0 0
    %1044 = vmatprep.mubr.bf16.mxu0 0
    %1045 = vmatmul.mubr.bf16.gmra.mxu0 %v939
    %v1046 = vpop.f32.mrf.mxu0
    %v1047 = vadd.f32 %v962, %v1046
    %v1048 = vpop.f32.mrf.mxu0
    %v1049 = vpop.f32.mrf.mxu0
    %v1050 = vpop.f32.mrf.mxu0
    %1051 = vdwg.mxu0
    %v1052 = vmax.f32 %v1047, 0.0
    %s1053 = scalar_lea.hbm %s2, 9216
    // Predicated region
    $region46: #{neural_net02_forward.1} parent=1 // pred_check
      _
    $region47: #{neural_net02_forward.1} parent=1 // pred_check_branch
      %1055 = sbr.rel target = $region49
    $region48: #{neural_net02_forward.1} parent=1 // pred_region
      %1056 = sst [smem:[#allocation8]] [#allocation27]
      %1057 = sst [smem:[#allocation9]] [#allocation26]
    $region49: #{neural_net02_forward.1} parent=1 // pred_fallthru
      _
    %1059 = shalt.err (0)
    %s1061 = sshll.u32 %s27, 4
    %s1062 = int_to_ptr.vmem [resolvable:$true] %s1061
    %1064 = dma.hbm_to_vmem [thread:$0]  %s1053, 1024, %s1062, %s28
    %s1065 = sshll.u32 %s41, 4
    %1066 = dma.done [#allocation3], %s1065
    %v1067 = vpack.c.bf16 %v1052, %v1052
    %v1068 = vld [vmem:[#allocation2] sm:$0xf]
    %v1069 = vld [vmem:[#allocation2 + $0x4] sm:$0xf]
    %v1070 = vld [vmem:[#allocation2 + $0x8] sm:$0xf]
    %v1071 = vld [vmem:[#allocation2 + $0xc] sm:$0xf]
    %v1072 = vld [vmem:[#allocation2 + $0x10] sm:$0xf]
    %v1073 = vld [vmem:[#allocation2 + $0x14] sm:$0xf]
    %v1074 = vld [vmem:[#allocation2 + $0x18] sm:$0xf]
    %v1075 = vld [vmem:[#allocation2 + $0x1c] sm:$0xf]
    %v1076 = vld [vmem:[#allocation2 + $0x20] sm:$0xf]
    %v1077 = vld [vmem:[#allocation2 + $0x24] sm:$0xf]
    %v1078 = vld [vmem:[#allocation2 + $0x28] sm:$0xf]
    %v1079 = vld [vmem:[#allocation2 + $0x2c] sm:$0xf]
    %v1080 = vld [vmem:[#allocation2 + $0x30] sm:$0xf]
    %v1081 = vld [vmem:[#allocation2 + $0x34] sm:$0xf]
    %v1082 = vld [vmem:[#allocation2 + $0x38] sm:$0xf]
    %v1083 = vld [vmem:[#allocation2 + $0x3c] sm:$0xf]
    %s1084 = scalar_lea.vmem %s1, 8
    %v1085 = vld [vmem:[%s1084] sm:$0x1]
    %v1087 = vlaneseq
    %v1088 = vshrl.u32 %v1087, 7
    %v1089 = vsub.s32 0, %v1088
    %v1090 = vrot.slane %v1085, %v1089
    %v1108 = vunpack.c.l.b16 %v1068
    %v1109 = vunpack.c.l.b16 %v1069
    %v1110 = vunpack.c.l.b16 %v1070
    %v1111 = vunpack.c.l.b16 %v1071
    %v1112 = vunpack.c.l.b16 %v1072
    %v1113 = vunpack.c.l.b16 %v1073
    %v1114 = vunpack.c.l.b16 %v1074
    %v1115 = vunpack.c.l.b16 %v1075
    %v1116 = vunpack.c.l.b16 %v1076
    %v1117 = vunpack.c.l.b16 %v1077
    %v1118 = vunpack.c.l.b16 %v1078
    %v1119 = vunpack.c.l.b16 %v1079
    %v1120 = vunpack.c.l.b16 %v1080
    %v1121 = vunpack.c.l.b16 %v1081
    %v1122 = vunpack.c.l.b16 %v1082
    %v1123 = vunpack.c.l.b16 %v1083
    %v1124 = vpack.c.b16 %v1109, %v1108
    %v1125 = vpack.c.b16 %v1111, %v1110
    %v1126 = vpack.c.b16 %v1113, %v1112
    %v1127 = vpack.c.b16 %v1115, %v1114
    %v1128 = vpack.c.b16 %v1117, %v1116
    %v1129 = vpack.c.b16 %v1119, %v1118
    %v1130 = vpack.c.b16 %v1121, %v1120
    %v1131 = vpack.c.b16 %v1123, %v1122
    %1140 = vmatprep.subr.bf16.mxu0 0
    %1141 = vmatpush1.bf16.msra.mxu0 %v1131
    %1142 = vmatprep.subr.bf16.mxu0 0
    %1143 = vmatpush1.bf16.msra.mxu0 %v1130
    %1144 = vmatprep.subr.bf16.mxu0 0
    %1145 = vmatpush1.bf16.msra.mxu0 %v1129
    %1146 = vmatprep.subr.bf16.mxu0 0
    %1147 = vmatpush1.bf16.msra.mxu0 %v1128
    %1148 = vmatprep.subr.bf16.mxu0 0
    %1149 = vmatpush1.bf16.msra.mxu0 %v1127
    %1150 = vmatprep.subr.bf16.mxu0 0
    %1151 = vmatpush1.bf16.msra.mxu0 %v1126
    %1152 = vmatprep.subr.bf16.mxu0 0
    %1153 = vmatpush1.bf16.msra.mxu0 %v1125
    %1154 = vmatprep.subr.bf16.mxu0 0
    %1155 = vmatpush1.bf16.msra.mxu0 %v1124
    %1156 = vmatprep.subr.bf16.mxu0 0
    %1157 = vmatpush2.bf16.msra.mxu0 0
    %1158 = vmatprep.subr.bf16.mxu0 0
    %1159 = vmatpush2.bf16.msra.mxu0 0
    %1160 = vmatprep.subr.bf16.mxu0 0
    %1161 = vmatpush2.bf16.msra.mxu0 0
    %1162 = vmatprep.subr.bf16.mxu0 0
    %1163 = vmatpush2.bf16.msra.mxu0 0
    %1164 = vmatprep.subr.bf16.mxu0 0
    %1165 = vmatpush2.bf16.msra.mxu0 0
    %1166 = vmatprep.subr.bf16.mxu0 0
    %1167 = vmatpush2.bf16.msra.mxu0 0
    %1168 = vmatprep.subr.bf16.mxu0 0
    %1169 = vmatpush2.bf16.msra.mxu0 0
    %1170 = vmatprep.subr.bf16.mxu0 0
    %1171 = vmatpush2.bf16.msra.mxu0 0
    %1172 = vmatprep.mubr.bf16.mxu0 0
    %1173 = vmatmul.mubr.bf16.gmra.mxu0 %v1067
    %v1174 = vpop.f32.mrf.mxu0
    %v1175 = vadd.f32 %v1090, %v1174
    %v1176 = vpop.f32.mrf.mxu0
    %v1177 = vpop.f32.mrf.mxu0
    %v1178 = vpop.f32.mrf.mxu0
    %1179 = vdwg.mxu0
    %v1180 = vmax.f32 %v1175, 0.0
    %s1181 = scalar_lea.hbm %s2, 10240
    // Predicated region
    $region50: #{neural_net02_forward.1} parent=1 // pred_check
      _
    $region51: #{neural_net02_forward.1} parent=1 // pred_check_branch
      %1183 = sbr.rel target = $region53
    $region52: #{neural_net02_forward.1} parent=1 // pred_region
      %1184 = sst [smem:[#allocation8]] [#allocation29]
      %1185 = sst [smem:[#allocation9]] [#allocation28]
    $region53: #{neural_net02_forward.1} parent=1 // pred_fallthru
      _
    %1187 = shalt.err (0)
    %s1189 = sshll.u32 [#allocation2], 4
    %s1190 = int_to_ptr.vmem [resolvable:$true] %s1189
    %1192 = dma.hbm_to_vmem [thread:$0]  %s1181, 1024, %s1190, [#allocation3]
    %s1193 = sshll.u32 %s41, 4
    %1194 = dma.done %s28, %s1193
    %v1195 = vpack.c.bf16 %v1180, %v1180
    %v1196 = vld [vmem:[%s27] sm:$0xf]
    %v1197 = vld [vmem:[%s27 + $0x4] sm:$0xf]
    %v1198 = vld [vmem:[%s27 + $0x8] sm:$0xf]
    %v1199 = vld [vmem:[%s27 + $0xc] sm:$0xf]
    %v1200 = vld [vmem:[%s27 + $0x10] sm:$0xf]
    %v1201 = vld [vmem:[%s27 + $0x14] sm:$0xf]
    %v1202 = vld [vmem:[%s27 + $0x18] sm:$0xf]
    %v1203 = vld [vmem:[%s27 + $0x1c] sm:$0xf]
    %v1204 = vld [vmem:[%s27 + $0x20] sm:$0xf]
    %v1205 = vld [vmem:[%s27 + $0x24] sm:$0xf]
    %v1206 = vld [vmem:[%s27 + $0x28] sm:$0xf]
    %v1207 = vld [vmem:[%s27 + $0x2c] sm:$0xf]
    %v1208 = vld [vmem:[%s27 + $0x30] sm:$0xf]
    %v1209 = vld [vmem:[%s27 + $0x34] sm:$0xf]
    %v1210 = vld [vmem:[%s27 + $0x38] sm:$0xf]
    %v1211 = vld [vmem:[%s27 + $0x3c] sm:$0xf]
    %s1212 = scalar_lea.vmem %s1, 9
    %v1213 = vld [vmem:[%s1212] sm:$0x1]
    %v1215 = vlaneseq
    %v1216 = vshrl.u32 %v1215, 7
    %v1217 = vsub.s32 0, %v1216
    %v1218 = vrot.slane %v1213, %v1217
    %v1236 = vunpack.c.l.b16 %v1196
    %v1237 = vunpack.c.l.b16 %v1197
    %v1238 = vunpack.c.l.b16 %v1198
    %v1239 = vunpack.c.l.b16 %v1199
    %v1240 = vunpack.c.l.b16 %v1200
    %v1241 = vunpack.c.l.b16 %v1201
    %v1242 = vunpack.c.l.b16 %v1202
    %v1243 = vunpack.c.l.b16 %v1203
    %v1244 = vunpack.c.l.b16 %v1204
    %v1245 = vunpack.c.l.b16 %v1205
    %v1246 = vunpack.c.l.b16 %v1206
    %v1247 = vunpack.c.l.b16 %v1207
    %v1248 = vunpack.c.l.b16 %v1208
    %v1249 = vunpack.c.l.b16 %v1209
    %v1250 = vunpack.c.l.b16 %v1210
    %v1251 = vunpack.c.l.b16 %v1211
    %v1252 = vpack.c.b16 %v1237, %v1236
    %v1253 = vpack.c.b16 %v1239, %v1238
    %v1254 = vpack.c.b16 %v1241, %v1240
    %v1255 = vpack.c.b16 %v1243, %v1242
    %v1256 = vpack.c.b16 %v1245, %v1244
    %v1257 = vpack.c.b16 %v1247, %v1246
    %v1258 = vpack.c.b16 %v1249, %v1248
    %v1259 = vpack.c.b16 %v1251, %v1250
    %1268 = vmatprep.subr.bf16.mxu0 0
    %1269 = vmatpush1.bf16.msra.mxu0 %v1259
    %1270 = vmatprep.subr.bf16.mxu0 0
    %1271 = vmatpush1.bf16.msra.mxu0 %v1258
    %1272 = vmatprep.subr.bf16.mxu0 0
    %1273 = vmatpush1.bf16.msra.mxu0 %v1257
    %1274 = vmatprep.subr.bf16.mxu0 0
    %1275 = vmatpush1.bf16.msra.mxu0 %v1256
    %1276 = vmatprep.subr.bf16.mxu0 0
    %1277 = vmatpush1.bf16.msra.mxu0 %v1255
    %1278 = vmatprep.subr.bf16.mxu0 0
    %1279 = vmatpush1.bf16.msra.mxu0 %v1254
    %1280 = vmatprep.subr.bf16.mxu0 0
    %1281 = vmatpush1.bf16.msra.mxu0 %v1253
    %1282 = vmatprep.subr.bf16.mxu0 0
    %1283 = vmatpush1.bf16.msra.mxu0 %v1252
    %1284 = vmatprep.subr.bf16.mxu0 0
    %1285 = vmatpush2.bf16.msra.mxu0 0
    %1286 = vmatprep.subr.bf16.mxu0 0
    %1287 = vmatpush2.bf16.msra.mxu0 0
    %1288 = vmatprep.subr.bf16.mxu0 0
    %1289 = vmatpush2.bf16.msra.mxu0 0
    %1290 = vmatprep.subr.bf16.mxu0 0
    %1291 = vmatpush2.bf16.msra.mxu0 0
    %1292 = vmatprep.subr.bf16.mxu0 0
    %1293 = vmatpush2.bf16.msra.mxu0 0
    %1294 = vmatprep.subr.bf16.mxu0 0
    %1295 = vmatpush2.bf16.msra.mxu0 0
    %1296 = vmatprep.subr.bf16.mxu0 0
    %1297 = vmatpush2.bf16.msra.mxu0 0
    %1298 = vmatprep.subr.bf16.mxu0 0
    %1299 = vmatpush2.bf16.msra.mxu0 0
    %1300 = vmatprep.mubr.bf16.mxu0 0
    %1301 = vmatmul.mubr.bf16.gmra.mxu0 %v1195
    %v1302 = vpop.f32.mrf.mxu0
    %v1303 = vadd.f32 %v1218, %v1302
    %v1304 = vpop.f32.mrf.mxu0
    %v1305 = vpop.f32.mrf.mxu0
    %v1306 = vpop.f32.mrf.mxu0
    %1307 = vdwg.mxu0
    %v1308 = vmax.f32 %v1303, 0.0
    %s1309 = sshll.u32 %s41, 4
    %1310 = dma.done [#allocation3], %s1309
    %v1311 = vpack.c.bf16 %v1308, %v1308
    %v1312 = vld [vmem:[#allocation2] sm:$0xf]
    %v1313 = vld [vmem:[#allocation2 + $0x4] sm:$0xf]
    %v1314 = vld [vmem:[#allocation2 + $0x8] sm:$0xf]
    %v1315 = vld [vmem:[#allocation2 + $0xc] sm:$0xf]
    %v1316 = vld [vmem:[#allocation2 + $0x10] sm:$0xf]
    %v1317 = vld [vmem:[#allocation2 + $0x14] sm:$0xf]
    %v1318 = vld [vmem:[#allocation2 + $0x18] sm:$0xf]
    %v1319 = vld [vmem:[#allocation2 + $0x1c] sm:$0xf]
    %v1320 = vld [vmem:[#allocation2 + $0x20] sm:$0xf]
    %v1321 = vld [vmem:[#allocation2 + $0x24] sm:$0xf]
    %v1322 = vld [vmem:[#allocation2 + $0x28] sm:$0xf]
    %v1323 = vld [vmem:[#allocation2 + $0x2c] sm:$0xf]
    %v1324 = vld [vmem:[#allocation2 + $0x30] sm:$0xf]
    %v1325 = vld [vmem:[#allocation2 + $0x34] sm:$0xf]
    %v1326 = vld [vmem:[#allocation2 + $0x38] sm:$0xf]
    %v1327 = vld [vmem:[#allocation2 + $0x3c] sm:$0xf]
    %s1328 = scalar_lea.vmem %s1, 10
    %v1329 = vld [vmem:[%s1328] sm:$0x1]
    %v1331 = vlaneseq
    %v1332 = vshrl.u32 %v1331, 7
    %v1333 = vsub.s32 0, %v1332
    %v1334 = vrot.slane %v1329, %v1333
    %v1352 = vunpack.c.l.b16 %v1312
    %v1353 = vunpack.c.l.b16 %v1313
    %v1354 = vunpack.c.l.b16 %v1314
    %v1355 = vunpack.c.l.b16 %v1315
    %v1356 = vunpack.c.l.b16 %v1316
    %v1357 = vunpack.c.l.b16 %v1317
    %v1358 = vunpack.c.l.b16 %v1318
    %v1359 = vunpack.c.l.b16 %v1319
    %v1360 = vunpack.c.l.b16 %v1320
    %v1361 = vunpack.c.l.b16 %v1321
    %v1362 = vunpack.c.l.b16 %v1322
    %v1363 = vunpack.c.l.b16 %v1323
    %v1364 = vunpack.c.l.b16 %v1324
    %v1365 = vunpack.c.l.b16 %v1325
    %v1366 = vunpack.c.l.b16 %v1326
    %v1367 = vunpack.c.l.b16 %v1327
    %v1368 = vpack.c.b16 %v1353, %v1352
    %v1369 = vpack.c.b16 %v1355, %v1354
    %v1370 = vpack.c.b16 %v1357, %v1356
    %v1371 = vpack.c.b16 %v1359, %v1358
    %v1372 = vpack.c.b16 %v1361, %v1360
    %v1373 = vpack.c.b16 %v1363, %v1362
    %v1374 = vpack.c.b16 %v1365, %v1364
    %v1375 = vpack.c.b16 %v1367, %v1366
    %1384 = vmatprep.subr.bf16.mxu0 0
    %1385 = vmatpush1.bf16.msra.mxu0 %v1375
    %1386 = vmatprep.subr.bf16.mxu0 0
    %1387 = vmatpush1.bf16.msra.mxu0 %v1374
    %1388 = vmatprep.subr.bf16.mxu0 0
    %1389 = vmatpush1.bf16.msra.mxu0 %v1373
    %1390 = vmatprep.subr.bf16.mxu0 0
    %1391 = vmatpush1.bf16.msra.mxu0 %v1372
    %1392 = vmatprep.subr.bf16.mxu0 0
    %1393 = vmatpush1.bf16.msra.mxu0 %v1371
    %1394 = vmatprep.subr.bf16.mxu0 0
    %1395 = vmatpush1.bf16.msra.mxu0 %v1370
    %1396 = vmatprep.subr.bf16.mxu0 0
    %1397 = vmatpush1.bf16.msra.mxu0 %v1369
    %1398 = vmatprep.subr.bf16.mxu0 0
    %1399 = vmatpush1.bf16.msra.mxu0 %v1368
    %1400 = vmatprep.subr.bf16.mxu0 0
    %1401 = vmatpush2.bf16.msra.mxu0 0
    %1402 = vmatprep.subr.bf16.mxu0 0
    %1403 = vmatpush2.bf16.msra.mxu0 0
    %1404 = vmatprep.subr.bf16.mxu0 0
    %1405 = vmatpush2.bf16.msra.mxu0 0
    %1406 = vmatprep.subr.bf16.mxu0 0
    %1407 = vmatpush2.bf16.msra.mxu0 0
    %1408 = vmatprep.subr.bf16.mxu0 0
    %1409 = vmatpush2.bf16.msra.mxu0 0
    %1410 = vmatprep.subr.bf16.mxu0 0
    %1411 = vmatpush2.bf16.msra.mxu0 0
    %1412 = vmatprep.subr.bf16.mxu0 0
    %1413 = vmatpush2.bf16.msra.mxu0 0
    %1414 = vmatprep.subr.bf16.mxu0 0
    %1415 = vmatpush2.bf16.msra.mxu0 0
    %1416 = vmatprep.mubr.bf16.mxu0 0
    %1417 = vmatmul.mubr.bf16.gmra.mxu0 %v1311
    %v1418 = vpop.f32.mrf.mxu0
    %v1419 = vadd.f32 %v1334, %v1418
    %v1420 = vpop.f32.mrf.mxu0
    %v1421 = vpop.f32.mrf.mxu0
    %v1422 = vpop.f32.mrf.mxu0
    %1423 = vdwg.mxu0
    %1424 = vst [vmem:[#allocation4] sm:$0xff] %v1419
    // Predicated region
    $region54: #{neural_net02_forward.1} parent=1 // pred_check
      _
    $region55: #{neural_net02_forward.1} parent=1 // pred_check_branch
      %1426 = sbr.rel (0) target = $region57
    $region56: #{neural_net02_forward.1} parent=1 // pred_region
      %s1428 = ssub.s32 128, 128
      %1429 = vsyncadd [#allocation5], %s1428
      %s1431 = sshll.u32 [#allocation4], 4
      %s1432 = int_to_ptr.vmem [resolvable:$true] %s1431
      %1434 = dma.vmem_to_hbm [thread:$0]  %s1432, 128, %s3, [#allocation5]
    $region57: #{neural_net02_forward.1} parent=1 // pred_fallthru
      _
    // Predicated region
    $region58: #{neural_net02_forward.1} parent=1 // pred_check
      _
    $region59: #{neural_net02_forward.1} parent=1 // pred_check_branch
      %1436 = sbr.rel (0) target = $region61
    $region60: #{neural_net02_forward.1} parent=1 // pred_region
      %1437 = dma.done [#allocation5], 128
    $region61: #{neural_net02_forward.1} parent=1 // pred_fallthru
      _
    %1438 = vsyncpa [#allocation5], 1
  %1439 = vsyncmov [#allocation3]
  %s1440 = vpop.sfrf %1439
  %p1441 = scmp.eq.s32.totalorder %s1440, 0
  %p1442 = pneg %p1441
  %1444 = shalt.err (%p1442)
  %s1445 = scalar_lea.sflag [#allocation3], 1
  %1446 = vsyncmov %s1445
  %s1447 = vpop.sfrf %1446
  %p1448 = scmp.eq.s32.totalorder %s1447, 0
  %p1449 = pneg %p1448
  %1451 = shalt.err (%p1449)

</llo_original>
